<compile_context>
chip_gen: v5e
topology: v5e:2x2
jax: 0.10.0
libtpu: 0.0.40
codegen_flags: <defaults>
</compile_context>

<pallas_src>
import functools

import jax
import jax.numpy as jnp
from jax import lax
from jax.experimental import pallas as pl
from jax.experimental.pallas import tpu as pltpu


# ------------------------------- fused kernel -------------------------------

def _aa_gat_kernel(
        x_ref, eattr_ref, s_ref, t_ref,
        nw1_ref, nb1_ref, nw2_ref, nb2_ref,
        ew1_ref, eb1_ref, ew2_ref, eb2_ref,
        wh_ref, ahs_ref, aht_ref, ahe_ref, exh_ref,
        wo_ref, aos_ref, aot_ref, aoe_ref, exo_ref,
        omask_ref,
        o_ref,
        x_s, xcat_s, val_s, asrc_s, accn_s, accd_s, m_s):
    f32 = jnp.float32
    layer = pl.program_id(0)          # 0 = multi-head layer, 1 = out_att
    et = pl.program_id(1)             # edge tile index (reduction axis)
    n_et = pl.num_programs(1)
    hp, padw = exh_ref.shape          # padded head count, lane-padded packed head width

    def mlp(v, w1, b1, w2, b2):
        h = jnp.dot(v, w1, preferred_element_type=f32) + b1
        h = jnp.maximum(h, 0.0)
        return jnp.dot(h, w2, preferred_element_type=f32) + b2

    def elu(v):
        # exp only of the non-positive branch so the discarded branch stays finite
        return jnp.where(v > 0.0, v, jnp.exp(jnp.minimum(v, 0.0)) - 1.0)

    def init_layer(h, a_src_ref, a_tgt_ref):
        # stationary operands for this layer:
        #   val_s = [h | alpha_tgt]   (fused T-gather matrix)
        #   asrc_s = alpha_src        (S-gather matrix)
        # plus zeroed node-resident accumulators and the running per-head max.
        val_s[:, :padw] = h
        val_s[:, padw:] = jnp.dot(h, a_tgt_ref[...], preferred_element_type=f32)
        asrc_s[...] = jnp.dot(h, a_src_ref[...], preferred_element_type=f32)
        accn_s[...] = jnp.zeros_like(accn_s)
        accd_s[...] = jnp.zeros_like(accd_s)
        m_s[...] = jnp.full(m_s.shape, -1e30, f32)

    @pl.when(jnp.logical_and(layer == 0, et == 0))
    def _():
        x = mlp(x_ref[...], nw1_ref[...], nb1_ref[...], nw2_ref[...], nb2_ref[...])
        x_s[...] = x
        init_layer(jnp.dot(x, wh_ref[...], preferred_element_type=f32), ahs_ref, aht_ref)

    @pl.when(jnp.logical_and(layer == 1, et == 0))
    def _():
        init_layer(jnp.dot(xcat_s[...], wo_ref[...], preferred_element_type=f32),
                   aos_ref, aot_ref)

    # ---------------- per-edge-tile body (every grid step) ----------------
    sel = (layer == 0).astype(f32)                                   # scalar blend
    a_edge = sel * ahe_ref[...] + (1.0 - sel) * aoe_ref[...]         # [EMB, Hp]
    expand = sel * exh_ref[...] + (1.0 - sel) * exo_ref[...]         # [Hp, PADW] 0/1

    ea = mlp(eattr_ref[...], ew1_ref[...], eb1_ref[...], ew2_ref[...], eb2_ref[...])
    alpha_edge = jnp.dot(ea, a_edge, preferred_element_type=f32)     # [TE, Hp]

    s = s_ref[...]                                                   # [TE, N] one_hot(src)
    t = t_ref[...]                                                   # [TE, N] one_hot(tgt)

    # fused T-gather: h[tgt] and alpha_tgt[tgt] in one MXU pass
    tg = jnp.dot(t, val_s[...], preferred_element_type=f32)          # [TE, PADW+Hp]
    ht = tg[:, :padw]
    alpha_tgt_pe = tg[:, padw:]
    alpha_src_pe = jnp.dot(s, asrc_s[...], preferred_element_type=f32)

    score = alpha_src_pe + alpha_tgt_pe + alpha_edge                 # [TE, Hp]
    score = jnp.where(score > 0.0, score, 0.01 * score)              # leaky_relu (torch default)
    # dropout on scores: identity (inference)

    # online per-head max (flash-style) keeps the E-tiled softmax shift globally consistent
    m_old = m_s[...]
    m_new = jnp.maximum(m_old, jnp.max(score, axis=0, keepdims=True))
    corr = jnp.exp(m_old - m_new)                                    # [1, Hp]
    accd_s[...] = accd_s[...] * corr
    accn_s[...] = accn_s[...] * jnp.dot(corr, expand, preferred_element_type=f32)
    m_s[...] = m_new

    e = jnp.exp(score - m_new)                                       # [TE, Hp]  (EUP)
    e_b = jnp.dot(e, expand, preferred_element_type=f32)             # per-head broadcast [TE, PADW]

    # scatter_add by src node == contraction over S's edge axis (no pre-transposed S_T)
    dn = (((0,), (0,)), ((), ()))
    accd_s[...] += lax.dot_general(s, e, dimension_numbers=dn,
                                   preferred_element_type=f32)       # [N, Hp]
    accn_s[...] += lax.dot_general(s, ht * e_b, dimension_numbers=dn,
                                   preferred_element_type=f32)       # [N, PADW]

    # ---------------- finalize the layer on its last edge tile ----------------
    def layer_output():
        # TODO(synk): pl.reciprocal(x, approx=True) would put this divide on the EUP.
        recip = 1.0 / (accd_s[...] + 1e-16)                          # [N, Hp]
        h_prime = accn_s[...] * jnp.dot(recip, expand, preferred_element_type=f32)
        return elu(h_prime)                                          # F.elu inside AA_GATlayer

    @pl.when(jnp.logical_and(layer == 0, et == n_et - 1))
    def _():
        xcat_s[...] = elu(layer_output())                            # glue F.elu; dropout identity

    @pl.when(jnp.logical_and(layer == 1, et == n_et - 1))
    def _():
        out = layer_output()                                         # [N, PADW]
        mask = omask_ref[...]                                        # 1 on the real out_dim lanes
        z = out * mask + (1.0 - mask) * (-1e30)                      # exclude padded lanes
        m = jnp.max(z, axis=1, keepdims=True)                        # log_softmax(dim=1)
        lse = m + jnp.log(jnp.sum(jnp.exp(z - m), axis=1, keepdims=True))
        o_ref[...] = (out - lse).astype(o_ref.dtype)


# --------------------------------- wrapper ----------------------------------

def _round_up(x, m):
    return ((x + m - 1) // m) * m


def _pack_gat_params(layers, din_pad, padw, hp, dout):
    """Pack per-head AA_GATlayer params, head-batched along lanes and zero-padded so
    every big matmul and the output store are lane-dense (multiples of 128)."""
    din = layers[0]["w"].shape[0]
    de = layers[0]["a_edge"].shape[0]
    w = jnp.zeros((din_pad, padw), jnp.float32)
    a_src = jnp.zeros((padw, hp), jnp.float32)
    a_tgt = jnp.zeros((padw, hp), jnp.float32)
    a_edge = jnp.zeros((de, hp), jnp.float32)
    expand = jnp.zeros((hp, padw), jnp.float32)
    for j, p in enumerate(layers):
        c0 = j * dout
        w = w.at[:din, c0:c0 + dout].set(p["w"].astype(jnp.float32))
        a_src = a_src.at[c0:c0 + dout, j].set(p["a_src"][:, 0].astype(jnp.float32))
        a_tgt = a_tgt.at[c0:c0 + dout, j].set(p["a_tgt"][:, 0].astype(jnp.float32))
        a_edge = a_edge.at[:, j].set(p["a_edge"][:, 0].astype(jnp.float32))
        expand = expand.at[j, c0:c0 + dout].set(1.0)
    return w, a_src, a_tgt, a_edge, expand


def aa_gat_forward(params, X, edge_index, edge_attr, matched_car_infra_nodes=None,
                   *, edge_tile=None):
    # matched_car_infra_nodes / cross_graph_attention are built in __init__ but never
    # used in AA_GAT.forward -> intentionally not computed here.
    n, node_dim = X.shape
    e = edge_index.shape[1]
    de = edge_attr.shape[1]

    np_ = params["node_embed"]
    ep_ = params["edge_attr_embed"]
    heads = len(params["attention_layers"])
    out_dim = params["out_att"]["w"].shape[1]
    embed = np_["w2"].shape[1]

    hp = heads
    padw = _round_up(max(heads * out_dim, out_dim), 128)   # lane-dense packed head width
    n_pad = _round_up(n, 8)

    wh, ahs, aht, ahe, exh = _pack_gat_params(params["attention_layers"], embed, padw, hp, out_dim)
    wo, aos, aot, aoe, exo = _pack_gat_params([params["out_att"]], padw, padw, hp, out_dim)
    omask = jnp.zeros((1, padw), jnp.float32).at[0, :out_dim].set(1.0)

    weights = (np_["w1"], np_["b1"], np_["w2"], np_["b2"],
               ep_["w1"], ep_["b1"], ep_["w2"], ep_["b2"],
               wh, ahs, aht, ahe, exh,
               wo, aos, aot, aoe, exo,
               omask)

    # ---- per-generation VMEM budget + edge tile size (derived from real byte counts) ----
    phys_vmem = 128 << 20                                   # v5e / v6e
    try:
        dev = jax.devices()[0]
        if dev.platform == "tpu" and "v7" in dev.device_kind.lower():
            phys_vmem = 64 << 20                            # v7x
    except Exception:
        pass

    weight_bytes = 4 * sum(int(w.size) for w in weights)
    scratch_bytes = 4 * (n_pad * (embed + 3 * padw + 3 * hp) + 2 * hp)
    resident = (2 * weight_bytes + scratch_bytes
                + 2 * 4 * n_pad * node_dim                  # X block
                + 2 * 4 * n_pad * padw)                     # output block
    per_edge_row = 4 * (2 * n_pad + de)                     # S + T + edge_attr, f32
    tile_budget = max(int(0.70 * phys_vmem) - resident, 2 * 8 * per_edge_row)
    auto_te = tile_budget // (2 * per_edge_row)             # 2x for double buffering
    te = auto_te if edge_tile is None else edge_tile
    te = int(max(8, min(te, 2048)) // 8 * 8)
    te = min(te, _round_up(e, 8))
    e_pad = _round_up(e, te)
    n_et = e_pad // te

    vmem_need = resident + 2 * te * per_edge_row + (4 << 20)
    vmem_limit = int(min(int(0.85 * phys_vmem), max(32 << 20, vmem_need)))

    # ---- build padded inputs (padded edges have all-zero one-hot rows -> no effect) ----
    x_pad = jnp.zeros((n_pad, node_dim), jnp.float32).at[:n].set(X.astype(jnp.float32))
    pad_e = e_pad - e
    src = jnp.concatenate([edge_index[0].astype(jnp.int32),
                           jnp.full((pad_e,), n_pad, jnp.int32)])
    tgt = jnp.concatenate([edge_index[1].astype(jnp.int32),
                           jnp.full((pad_e,), n_pad, jnp.int32)])
    ea_pad = jnp.zeros((e_pad, de), jnp.float32).at[:e].set(edge_attr.astype(jnp.float32))
    S = jax.nn.one_hot(src, n_pad, dtype=jnp.float32)       # [E_pad, N_pad]
    T = jax.nn.one_hot(tgt, n_pad, dtype=jnp.float32)

    const2d = lambda l, t: (0, 0)
    edge2d = lambda l, t: (t, 0)
    in_specs = ([pl.BlockSpec((n_pad, node_dim), const2d),          # X
                 pl.BlockSpec((te, de), edge2d),                    # edge_attr tile
                 pl.BlockSpec((te, n_pad), edge2d),                 # S tile
                 pl.BlockSpec((te, n_pad), edge2d)]                 # T tile
                + [pl.BlockSpec(w.shape, const2d) for w in weights])

    # advisory cost hint so XLA schedules surrounding ops around the custom call
    flops = int(2 * n_pad * embed * (node_dim + embed)
                + 2 * 2 * e_pad * embed * (de + embed)
                + 2 * n_pad * padw * (embed + padw)
                + 2 * 2 * e_pad * n_pad * (2 * padw + 2 * hp))
    trans = int(2 * e_pad * hp + 5 * n_pad * padw)
    bytes_accessed = int(4 * (n_pad * node_dim + e_pad * de + 2 * e_pad * n_pad * 2
                              + n_pad * padw) + weight_bytes)

    out = pl.pallas_call(
        _aa_gat_kernel,
        out_shape=jax.ShapeDtypeStruct((n_pad, padw), jnp.float32),
        grid_spec=pltpu.PrefetchScalarGridSpec(
            num_scalar_prefetch=0,
            grid=(2, n_et),                                  # (layer phase, edge tiles)
            in_specs=in_specs,
            out_specs=pl.BlockSpec((n_pad, padw), const2d),
            scratch_shapes=[
                pltpu.VMEM((n_pad, embed), jnp.float32),          # x_s  : node MLP output
                pltpu.VMEM((n_pad, padw), jnp.float32),           # xcat_s: layer-0 output
                pltpu.VMEM((n_pad, padw + hp), jnp.float32),      # val_s : [h | alpha_tgt]
                pltpu.VMEM((n_pad, hp), jnp.float32),             # asrc_s: alpha_src
                pltpu.VMEM((n_pad, padw), jnp.float32),           # accn_s: numerator acc
                pltpu.VMEM((n_pad, hp), jnp.float32),             # accd_s: denominator acc
                pltpu.VMEM((1, hp), jnp.float32),                 # m_s   : running max
            ]),
        compiler_params=pltpu.CompilerParams(
            dimension_semantics=("arbitrary", "arbitrary"),
            vmem_limit_bytes=vmem_limit),
        cost_estimate=pl.CostEstimate(flops=flops, transcendentals=trans,
                                      bytes_accessed=bytes_accessed),
    )(x_pad, ea_pad, S, T, *weights)

    return out[:n, :out_dim]


# ----------------------------- pure-JAX reference ----------------------------

def _reference_forward(params, X, edge_index, edge_attr):
    def mlp(v, p):
        h = jnp.maximum(v @ p["w1"] + p["b1"], 0.0)
        return h @ p["w2"] + p["b2"]

    def elu(v):
        return jnp.where(v > 0, v, jnp.exp(jnp.minimum(v, 0.0)) - 1.0)

    def gat_layer(x, ea, p, n):
        src, tgt = edge_index
        h = x @ p["w"]
        score = (h[src] @ p["a_src"] + h[tgt] @ p["a_tgt"] + ea @ p["a_edge"])[:, 0]
        score = jnp.where(score > 0, score, 0.01 * score)
        score = score - score.max()
        e = jnp.exp(score)
        denom = jnp.zeros((n,), jnp.float32).at[src].add(e)[src]
        attn = e / (denom + 1e-16)
        h_prime = jnp.zeros_like(h).at[src].add(h[tgt] * attn[:, None])
        return elu(h_prime)

    n = X.shape[0]
    x = mlp(X, params["node_embed"])
    ea = mlp(edge_attr, params["edge_attr_embed"])
    x = jnp.concatenate([gat_layer(x, ea, p, n) for p in params["attention_layers"]], axis=1)
    x = elu(x)
    out = gat_layer(x, ea, params["out_att"], n)
    return jax.nn.log_softmax(out, axis=1)


# --------------------------- deterministic init ---------------------------

def init_params(key, node_dim, embed_dim, out_dim, edge_attr_dim, num_heads):
    keys = iter(jax.random.split(key, 128))

    def lin(din, dout):
        return jax.random.normal(next(keys), (din, dout), jnp.float32) / jnp.sqrt(float(din))

    def mlp_p(din, dout):
        return {"w1": lin(din, dout),
                "b1": 0.01 * jax.random.normal(next(keys), (1, dout), jnp.float32),
                "w2": lin(dout, dout),
                "b2": 0.01 * jax.random.normal(next(keys), (1, dout), jnp.float32)}

    def gat_p(din, dout, dedge):
        return {"w": lin(din, dout),      # nn.Linear(din, dout, bias=False)
                "a_src": lin(dout, 1),    # slice of a over h[src]
                "a_tgt": lin(dout, 1),    # slice of a over h[tgt]
                "a_edge": lin(dedge, 1)}  # slice of a over edge_attr
                # out_transform is unused in AA_GATlayer.forward -> omitted

    return {
        "node_embed": mlp_p(node_dim, embed_dim),
        "edge_attr_embed": mlp_p(edge_attr_dim, embed_dim),
        "attention_layers": [gat_p(embed_dim, out_dim, embed_dim) for _ in range(num_heads)],
        "out_att": gat_p(out_dim * num_heads, out_dim, embed_dim),
    }


if __name__ == "__main__":
    # small shapes consistent with the module
    N, E = 8, 16
    node_dim, embed_dim, out_dim, edge_attr_dim, num_heads = 8, 32, 16, 8, 4

    key = jax.random.PRNGKey(0)
    k_par, k_x, k_e, k_ea = jax.random.split(key, 4)

    params = init_params(k_par, node_dim, embed_dim, out_dim, edge_attr_dim, num_heads)
    X = jax.random.normal(k_x, (N, node_dim), jnp.float32)
    edge_index = jax.random.randint(k_e, (2, E), 0, N, dtype=jnp.int32)
    edge_attr = jax.random.normal(k_ea, (E, edge_attr_dim), jnp.float32)

    # edge_tile=8 -> two edge tiles, exercising the E grid + online-max path
    fwd = jax.jit(functools.partial(aa_gat_forward, edge_tile=8))
    out = fwd(params, X, edge_index, edge_attr)
    jax.block_until_ready(out)

    assert out.shape == (N, out_dim)
    assert bool(jnp.all(jnp.isfinite(out)))

    ref = _reference_forward(params, X, edge_index, edge_attr)
    err = float(jnp.max(jnp.abs(out - ref)))
    assert bool(jnp.allclose(out, ref, atol=2e-3, rtol=2e-3)), f"max abs err {err}"
    print("KERNEL_OK")
</pallas_src>

<mosaic_0001>
module attributes {stable_mosaic.version = 11 : i64} {
  func.func @_aa_gat_kernel(%arg0: i32, %arg1: i32, %arg2: memref<8x8xf32, #tpu.memory_space<vmem>>, %arg3: memref<8x8xf32, #tpu.memory_space<vmem>>, %arg4: memref<8x8xf32, #tpu.memory_space<vmem>>, %arg5: memref<8x8xf32, #tpu.memory_space<vmem>>, %arg6: memref<8x32xf32, #tpu.memory_space<vmem>>, %arg7: memref<1x32xf32, #tpu.memory_space<vmem>>, %arg8: memref<32x32xf32, #tpu.memory_space<vmem>>, %arg9: memref<1x32xf32, #tpu.memory_space<vmem>>, %arg10: memref<8x32xf32, #tpu.memory_space<vmem>>, %arg11: memref<1x32xf32, #tpu.memory_space<vmem>>, %arg12: memref<32x32xf32, #tpu.memory_space<vmem>>, %arg13: memref<1x32xf32, #tpu.memory_space<vmem>>, %arg14: memref<32x128xf32, #tpu.memory_space<vmem>>, %arg15: memref<128x4xf32, #tpu.memory_space<vmem>>, %arg16: memref<128x4xf32, #tpu.memory_space<vmem>>, %arg17: memref<32x4xf32, #tpu.memory_space<vmem>>, %arg18: memref<4x128xf32, #tpu.memory_space<vmem>>, %arg19: memref<128x128xf32, #tpu.memory_space<vmem>>, %arg20: memref<128x4xf32, #tpu.memory_space<vmem>>, %arg21: memref<128x4xf32, #tpu.memory_space<vmem>>, %arg22: memref<32x4xf32, #tpu.memory_space<vmem>>, %arg23: memref<4x128xf32, #tpu.memory_space<vmem>>, %arg24: memref<1x128xf32, #tpu.memory_space<vmem>>, %arg25: memref<8x128xf32, #tpu.memory_space<vmem>>, %arg26: memref<8x32xf32, #tpu.memory_space<vmem>>, %arg27: memref<8x128xf32, #tpu.memory_space<vmem>>, %arg28: memref<8x132xf32, #tpu.memory_space<vmem>>, %arg29: memref<8x4xf32, #tpu.memory_space<vmem>>, %arg30: memref<8x128xf32, #tpu.memory_space<vmem>>, %arg31: memref<8x4xf32, #tpu.memory_space<vmem>>, %arg32: memref<1x4xf32, #tpu.memory_space<vmem>>) attributes {dimension_semantics = [#tpu.dimension_semantics<arbitrary>, #tpu.dimension_semantics<arbitrary>], iteration_bounds = array<i64: 2, 2>, scalar_prefetch = 0 : i64, scratch_operands = 7 : i64, tpu.core_type = #tpu.core_type<tc>, window_params = [{pipeline_mode = #tpu.pipeline_mode<synchronous>, transform_indices = @transform_0, window_bounds = array<i64: 8, 8>}, {transform_indices = @transform_1, window_bounds = array<i64: 8, 8>}, {transform_indices = @transform_2, window_bounds = array<i64: 8, 8>}, {transform_indices = @transform_3, window_bounds = array<i64: 8, 8>}, {pipeline_mode = #tpu.pipeline_mode<synchronous>, transform_indices = @transform_4, window_bounds = array<i64: 8, 32>}, {pipeline_mode = #tpu.pipeline_mode<synchronous>, transform_indices = @transform_5, window_bounds = array<i64: 1, 32>}, {pipeline_mode = #tpu.pipeline_mode<synchronous>, transform_indices = @transform_6, window_bounds = array<i64: 32, 32>}, {pipeline_mode = #tpu.pipeline_mode<synchronous>, transform_indices = @transform_7, window_bounds = array<i64: 1, 32>}, {pipeline_mode = #tpu.pipeline_mode<synchronous>, transform_indices = @transform_8, window_bounds = array<i64: 8, 32>}, {pipeline_mode = #tpu.pipeline_mode<synchronous>, transform_indices = @transform_9, window_bounds = array<i64: 1, 32>}, {pipeline_mode = #tpu.pipeline_mode<synchronous>, transform_indices = @transform_10, window_bounds = array<i64: 32, 32>}, {pipeline_mode = #tpu.pipeline_mode<synchronous>, transform_indices = @transform_11, window_bounds = array<i64: 1, 32>}, {pipeline_mode = #tpu.pipeline_mode<synchronous>, transform_indices = @transform_12, window_bounds = array<i64: 32, 128>}, {pipeline_mode = #tpu.pipeline_mode<synchronous>, transform_indices = @transform_13, window_bounds = array<i64: 128, 4>}, {pipeline_mode = #tpu.pipeline_mode<synchronous>, transform_indices = @transform_14, window_bounds = array<i64: 128, 4>}, {pipeline_mode = #tpu.pipeline_mode<synchronous>, transform_indices = @transform_15, window_bounds = array<i64: 32, 4>}, {pipeline_mode = #tpu.pipeline_mode<synchronous>, transform_indices = @transform_16, window_bounds = array<i64: 4, 128>}, {pipeline_mode = #tpu.pipeline_mode<synchronous>, transform_indices = @transform_17, window_bounds = array<i64: 128, 128>}, {pipeline_mode = #tpu.pipeline_mode<synchronous>, transform_indices = @transform_18, window_bounds = array<i64: 128, 4>}, {pipeline_mode = #tpu.pipeline_mode<synchronous>, transform_indices = @transform_19, window_bounds = array<i64: 128, 4>}, {pipeline_mode = #tpu.pipeline_mode<synchronous>, transform_indices = @transform_20, window_bounds = array<i64: 32, 4>}, {pipeline_mode = #tpu.pipeline_mode<synchronous>, transform_indices = @transform_21, window_bounds = array<i64: 4, 128>}, {pipeline_mode = #tpu.pipeline_mode<synchronous>, transform_indices = @transform_22, window_bounds = array<i64: 1, 128>}, {pipeline_mode = #tpu.pipeline_mode<synchronous>, transform_indices = @transform_23, window_bounds = array<i64: 8, 128>}]} {
    %c0_i32 = arith.constant 0 : i32
    %0 = arith.cmpi eq, %arg0, %c0_i32 : i32
    %c0_i32_0 = arith.constant 0 : i32
    %1 = arith.cmpi eq, %arg1, %c0_i32_0 : i32
    %2 = arith.andi %0, %1 : i1
    %3 = arith.extui %2 : i1 to i32
    %c0_i32_1 = arith.constant 0 : i32
    %4 = arith.cmpi ne, %3, %c0_i32_1 : i32
    scf.if %4 {
      %c0_70 = arith.constant 0 : index
      %c0_71 = arith.constant 0 : index
      %97 = vector.load %arg2[%c0_70, %c0_71] : memref<8x8xf32, #tpu.memory_space<vmem>>, vector<8x8xf32>
      %c0_72 = arith.constant 0 : index
      %c0_73 = arith.constant 0 : index
      %98 = vector.load %arg6[%c0_72, %c0_73] : memref<8x32xf32, #tpu.memory_space<vmem>>, vector<8x32xf32>
      %c0_74 = arith.constant 0 : index
      %c0_75 = arith.constant 0 : index
      %99 = vector.load %arg7[%c0_74, %c0_75] : memref<1x32xf32, #tpu.memory_space<vmem>>, vector<1x32xf32>
      %c0_76 = arith.constant 0 : index
      %c0_77 = arith.constant 0 : index
      %100 = vector.load %arg8[%c0_76, %c0_77] : memref<32x32xf32, #tpu.memory_space<vmem>>, vector<32x32xf32>
      %c0_78 = arith.constant 0 : index
      %c0_79 = arith.constant 0 : index
      %101 = vector.load %arg9[%c0_78, %c0_79] : memref<1x32xf32, #tpu.memory_space<vmem>>, vector<1x32xf32>
      %cst_80 = arith.constant dense<0.000000e+00> : vector<8x32xf32>
      %102 = tpu.matmul %97, %98, %cst_80 {dimension_numbers = #tpu.dot_dimension_numbers<[1], [0], [0], [1], [0, 0, 1, 1], [], []>} : vector<8x8xf32>, vector<8x32xf32>, vector<8x32xf32> -> vector<8x32xf32>
      %103 = vector.broadcast %99 : vector<1x32xf32> to vector<8x32xf32>
      %104 = arith.addf %102, %103 : vector<8x32xf32>
      %cst_81 = arith.constant 0.000000e+00 : f32
      %105 = vector.broadcast %cst_81 : f32 to vector<8x32xf32>
      %106 = arith.maximumf %104, %105 : vector<8x32xf32>
      %cst_82 = arith.constant dense<0.000000e+00> : vector<8x32xf32>
      %107 = tpu.matmul %106, %100, %cst_82 {dimension_numbers = #tpu.dot_dimension_numbers<[1], [0], [0], [1], [0, 0, 1, 1], [], []>} : vector<8x32xf32>, vector<32x32xf32>, vector<8x32xf32> -> vector<8x32xf32>
      %108 = vector.broadcast %101 : vector<1x32xf32> to vector<8x32xf32>
      %109 = arith.addf %107, %108 : vector<8x32xf32>
      %c0_83 = arith.constant 0 : index
      %c0_84 = arith.constant 0 : index
      %110 = vector.load %arg26[%c0_83, %c0_84] : memref<8x32xf32, #tpu.memory_space<vmem>>, vector<8x32xf32>
      tpu.vector_store %arg26[%c0_83, %c0_84], %109 {strides = array<i32>} : memref<8x32xf32, #tpu.memory_space<vmem>>, vector<8x32xf32>,
      %c0_85 = arith.constant 0 : index
      %c0_86 = arith.constant 0 : index
      %111 = vector.load %arg14[%c0_85, %c0_86] : memref<32x128xf32, #tpu.memory_space<vmem>>, vector<32x128xf32>
      %cst_87 = arith.constant dense<0.000000e+00> : vector<8x128xf32>
      %112 = tpu.matmul %109, %111, %cst_87 {dimension_numbers = #tpu.dot_dimension_numbers<[1], [0], [0], [1], [0, 0, 1, 1], [], []>} : vector<8x32xf32>, vector<32x128xf32>, vector<8x128xf32> -> vector<8x128xf32>
      %c0_88 = arith.constant 0 : index
      %c0_89 = arith.constant 0 : index
      %113 = vector.load %arg28[%c0_88, %c0_89] : memref<8x132xf32, #tpu.memory_space<vmem>>, vector<8x128xf32>
      tpu.vector_store %arg28[%c0_88, %c0_89], %112 {strides = array<i32>} : memref<8x132xf32, #tpu.memory_space<vmem>>, vector<8x128xf32>,
      %c0_90 = arith.constant 0 : index
      %c0_91 = arith.constant 0 : index
      %114 = vector.load %arg16[%c0_90, %c0_91] : memref<128x4xf32, #tpu.memory_space<vmem>>, vector<128x4xf32>
      %cst_92 = arith.constant dense<0.000000e+00> : vector<8x4xf32>
      %115 = tpu.matmul %112, %114, %cst_92 {dimension_numbers = #tpu.dot_dimension_numbers<[1], [0], [0], [1], [0, 0, 1, 1], [], []>} : vector<8x128xf32>, vector<128x4xf32>, vector<8x4xf32> -> vector<8x4xf32>
      %c0_93 = arith.constant 0 : index
      %c128 = arith.constant 128 : index
      %116 = vector.load %arg28[%c0_93, %c128] : memref<8x132xf32, #tpu.memory_space<vmem>>, vector<8x4xf32>
      tpu.vector_store %arg28[%c0_93, %c128], %115 {strides = array<i32>} : memref<8x132xf32, #tpu.memory_space<vmem>>, vector<8x4xf32>,
      %c0_94 = arith.constant 0 : index
      %c0_95 = arith.constant 0 : index
      %117 = vector.load %arg15[%c0_94, %c0_95] : memref<128x4xf32, #tpu.memory_space<vmem>>, vector<128x4xf32>
      %cst_96 = arith.constant dense<0.000000e+00> : vector<8x4xf32>
      %118 = tpu.matmul %112, %117, %cst_96 {dimension_numbers = #tpu.dot_dimension_numbers<[1], [0], [0], [1], [0, 0, 1, 1], [], []>} : vector<8x128xf32>, vector<128x4xf32>, vector<8x4xf32> -> vector<8x4xf32>
      %c0_97 = arith.constant 0 : index
      %c0_98 = arith.constant 0 : index
      %119 = vector.load %arg29[%c0_97, %c0_98] : memref<8x4xf32, #tpu.memory_space<vmem>>, vector<8x4xf32>
      tpu.vector_store %arg29[%c0_97, %c0_98], %118 {strides = array<i32>} : memref<8x4xf32, #tpu.memory_space<vmem>>, vector<8x4xf32>,
      %cst_99 = arith.constant 0.000000e+00 : f32
      %120 = vector.broadcast %cst_99 : f32 to vector<8x128xf32>
      %c0_100 = arith.constant 0 : index
      %c0_101 = arith.constant 0 : index
      %121 = vector.load %arg30[%c0_100, %c0_101] : memref<8x128xf32, #tpu.memory_space<vmem>>, vector<8x128xf32>
      tpu.vector_store %arg30[%c0_100, %c0_101], %120 {strides = array<i32>} : memref<8x128xf32, #tpu.memory_space<vmem>>, vector<8x128xf32>,
      %cst_102 = arith.constant 0.000000e+00 : f32
      %122 = vector.broadcast %cst_102 : f32 to vector<8x4xf32>
      %c0_103 = arith.constant 0 : index
      %c0_104 = arith.constant 0 : index
      %123 = vector.load %arg31[%c0_103, %c0_104] : memref<8x4xf32, #tpu.memory_space<vmem>>, vector<8x4xf32>
      tpu.vector_store %arg31[%c0_103, %c0_104], %122 {strides = array<i32>} : memref<8x4xf32, #tpu.memory_space<vmem>>, vector<8x4xf32>,
      %cst_105 = arith.constant -1.000000e+30 : f32
      %124 = vector.broadcast %cst_105 : f32 to vector<1x4xf32>
      %c0_106 = arith.constant 0 : index
      %c0_107 = arith.constant 0 : index
      %125 = vector.load %arg32[%c0_106, %c0_107] : memref<1x4xf32, #tpu.memory_space<vmem>>, vector<1x4xf32>
      tpu.vector_store %arg32[%c0_106, %c0_107], %124 {strides = array<i32>} : memref<1x4xf32, #tpu.memory_space<vmem>>, vector<1x4xf32>,
    } else {
    }
    %c1_i32 = arith.constant 1 : i32
    %5 = arith.cmpi eq, %arg0, %c1_i32 : i32
    %c0_i32_2 = arith.constant 0 : i32
    %6 = arith.cmpi eq, %arg1, %c0_i32_2 : i32
    %7 = arith.andi %5, %6 : i1
    %8 = arith.extui %7 : i1 to i32
    %c0_i32_3 = arith.constant 0 : i32
    %9 = arith.cmpi ne, %8, %c0_i32_3 : i32
    scf.if %9 {
      %c0_70 = arith.constant 0 : index
      %c0_71 = arith.constant 0 : index
      %97 = vector.load %arg27[%c0_70, %c0_71] : memref<8x128xf32, #tpu.memory_space<vmem>>, vector<8x128xf32>
      %c0_72 = arith.constant 0 : index
      %c0_73 = arith.constant 0 : index
      %98 = vector.load %arg19[%c0_72, %c0_73] : memref<128x128xf32, #tpu.memory_space<vmem>>, vector<128x128xf32>
      %cst_74 = arith.constant dense<0.000000e+00> : vector<8x128xf32>
      %99 = tpu.matmul %97, %98, %cst_74 {dimension_numbers = #tpu.dot_dimension_numbers<[1], [0], [0], [1], [0, 0, 1, 1], [], []>} : vector<8x128xf32>, vector<128x128xf32>, vector<8x128xf32> -> vector<8x128xf32>
      %c0_75 = arith.constant 0 : index
      %c0_76 = arith.constant 0 : index
      %100 = vector.load %arg28[%c0_75, %c0_76] : memref<8x132xf32, #tpu.memory_space<vmem>>, vector<8x128xf32>
      tpu.vector_store %arg28[%c0_75, %c0_76], %99 {strides = array<i32>} : memref<8x132xf32, #tpu.memory_space<vmem>>, vector<8x128xf32>,
      %c0_77 = arith.constant 0 : index
      %c0_78 = arith.constant 0 : index
      %101 = vector.load %arg21[%c0_77, %c0_78] : memref<128x4xf32, #tpu.memory_space<vmem>>, vector<128x4xf32>
      %cst_79 = arith.constant dense<0.000000e+00> : vector<8x4xf32>
      %102 = tpu.matmul %99, %101, %cst_79 {dimension_numbers = #tpu.dot_dimension_numbers<[1], [0], [0], [1], [0, 0, 1, 1], [], []>} : vector<8x128xf32>, vector<128x4xf32>, vector<8x4xf32> -> vector<8x4xf32>
      %c0_80 = arith.constant 0 : index
      %c128 = arith.constant 128 : index
      %103 = vector.load %arg28[%c0_80, %c128] : memref<8x132xf32, #tpu.memory_space<vmem>>, vector<8x4xf32>
      tpu.vector_store %arg28[%c0_80, %c128], %102 {strides = array<i32>} : memref<8x132xf32, #tpu.memory_space<vmem>>, vector<8x4xf32>,
      %c0_81 = arith.constant 0 : index
      %c0_82 = arith.constant 0 : index
      %104 = vector.load %arg20[%c0_81, %c0_82] : memref<128x4xf32, #tpu.memory_space<vmem>>, vector<128x4xf32>
      %cst_83 = arith.constant dense<0.000000e+00> : vector<8x4xf32>
      %105 = tpu.matmul %99, %104, %cst_83 {dimension_numbers = #tpu.dot_dimension_numbers<[1], [0], [0], [1], [0, 0, 1, 1], [], []>} : vector<8x128xf32>, vector<128x4xf32>, vector<8x4xf32> -> vector<8x4xf32>
      %c0_84 = arith.constant 0 : index
      %c0_85 = arith.constant 0 : index
      %106 = vector.load %arg29[%c0_84, %c0_85] : memref<8x4xf32, #tpu.memory_space<vmem>>, vector<8x4xf32>
      tpu.vector_store %arg29[%c0_84, %c0_85], %105 {strides = array<i32>} : memref<8x4xf32, #tpu.memory_space<vmem>>, vector<8x4xf32>,
      %cst_86 = arith.constant 0.000000e+00 : f32
      %107 = vector.broadcast %cst_86 : f32 to vector<8x128xf32>
      %c0_87 = arith.constant 0 : index
      %c0_88 = arith.constant 0 : index
      %108 = vector.load %arg30[%c0_87, %c0_88] : memref<8x128xf32, #tpu.memory_space<vmem>>, vector<8x128xf32>
      tpu.vector_store %arg30[%c0_87, %c0_88], %107 {strides = array<i32>} : memref<8x128xf32, #tpu.memory_space<vmem>>, vector<8x128xf32>,
      %cst_89 = arith.constant 0.000000e+00 : f32
      %109 = vector.broadcast %cst_89 : f32 to vector<8x4xf32>
      %c0_90 = arith.constant 0 : index
      %c0_91 = arith.constant 0 : index
      %110 = vector.load %arg31[%c0_90, %c0_91] : memref<8x4xf32, #tpu.memory_space<vmem>>, vector<8x4xf32>
      tpu.vector_store %arg31[%c0_90, %c0_91], %109 {strides = array<i32>} : memref<8x4xf32, #tpu.memory_space<vmem>>, vector<8x4xf32>,
      %cst_92 = arith.constant -1.000000e+30 : f32
      %111 = vector.broadcast %cst_92 : f32 to vector<1x4xf32>
      %c0_93 = arith.constant 0 : index
      %c0_94 = arith.constant 0 : index
      %112 = vector.load %arg32[%c0_93, %c0_94] : memref<1x4xf32, #tpu.memory_space<vmem>>, vector<1x4xf32>
      tpu.vector_store %arg32[%c0_93, %c0_94], %111 {strides = array<i32>} : memref<1x4xf32, #tpu.memory_space<vmem>>, vector<1x4xf32>,
    } else {
    }
    %c0_i32_4 = arith.constant 0 : i32
    %10 = arith.cmpi eq, %arg0, %c0_i32_4 : i32
    %11 = arith.extui %10 : i1 to i32
    %12 = arith.sitofp %11 : i32 to f32
    %c0 = arith.constant 0 : index
    %c0_5 = arith.constant 0 : index
    %13 = vector.load %arg17[%c0, %c0_5] : memref<32x4xf32, #tpu.memory_space<vmem>>, vector<32x4xf32>
    %14 = vector.broadcast %12 : f32 to vector<32x4xf32>
    %15 = arith.mulf %14, %13 : vector<32x4xf32>
    %cst = arith.constant 1.000000e+00 : f32
    %16 = arith.subf %cst, %12 : f32
    %c0_6 = arith.constant 0 : index
    %c0_7 = arith.constant 0 : index
    %17 = vector.load %arg22[%c0_6, %c0_7] : memref<32x4xf32, #tpu.memory_space<vmem>>, vector<32x4xf32>
    %18 = vector.broadcast %16 : f32 to vector<32x4xf32>
    %19 = arith.mulf %18, %17 : vector<32x4xf32>
    %20 = arith.addf %15, %19 : vector<32x4xf32>
    %c0_8 = arith.constant 0 : index
    %c0_9 = arith.constant 0 : index
    %21 = vector.load %arg18[%c0_8, %c0_9] : memref<4x128xf32, #tpu.memory_space<vmem>>, vector<4x128xf32>
    %22 = vector.broadcast %12 : f32 to vector<4x128xf32>
    %23 = arith.mulf %22, %21 : vector<4x128xf32>
    %cst_10 = arith.constant 1.000000e+00 : f32
    %24 = arith.subf %cst_10, %12 : f32
    %c0_11 = arith.constant 0 : index
    %c0_12 = arith.constant 0 : index
    %25 = vector.load %arg23[%c0_11, %c0_12] : memref<4x128xf32, #tpu.memory_space<vmem>>, vector<4x128xf32>
    %26 = vector.broadcast %24 : f32 to vector<4x128xf32>
    %27 = arith.mulf %26, %25 : vector<4x128xf32>
    %28 = arith.addf %23, %27 : vector<4x128xf32>
    %c0_13 = arith.constant 0 : index
    %c0_14 = arith.constant 0 : index
    %29 = vector.load %arg3[%c0_13, %c0_14] : memref<8x8xf32, #tpu.memory_space<vmem>>, vector<8x8xf32>
    %c0_15 = arith.constant 0 : index
    %c0_16 = arith.constant 0 : index
    %30 = vector.load %arg10[%c0_15, %c0_16] : memref<8x32xf32, #tpu.memory_space<vmem>>, vector<8x32xf32>
    %c0_17 = arith.constant 0 : index
    %c0_18 = arith.constant 0 : index
    %31 = vector.load %arg11[%c0_17, %c0_18] : memref<1x32xf32, #tpu.memory_space<vmem>>, vector<1x32xf32>
    %c0_19 = arith.constant 0 : index
    %c0_20 = arith.constant 0 : index
    %32 = vector.load %arg12[%c0_19, %c0_20] : memref<32x32xf32, #tpu.memory_space<vmem>>, vector<32x32xf32>
    %c0_21 = arith.constant 0 : index
    %c0_22 = arith.constant 0 : index
    %33 = vector.load %arg13[%c0_21, %c0_22] : memref<1x32xf32, #tpu.memory_space<vmem>>, vector<1x32xf32>
    %cst_23 = arith.constant dense<0.000000e+00> : vector<8x32xf32>
    %34 = tpu.matmul %29, %30, %cst_23 {dimension_numbers = #tpu.dot_dimension_numbers<[1], [0], [0], [1], [0, 0, 1, 1], [], []>} : vector<8x8xf32>, vector<8x32xf32>, vector<8x32xf32> -> vector<8x32xf32>
    %35 = vector.broadcast %31 : vector<1x32xf32> to vector<8x32xf32>
    %36 = arith.addf %34, %35 : vector<8x32xf32>
    %cst_24 = arith.constant 0.000000e+00 : f32
    %37 = vector.broadcast %cst_24 : f32 to vector<8x32xf32>
    %38 = arith.maximumf %36, %37 : vector<8x32xf32>
    %cst_25 = arith.constant dense<0.000000e+00> : vector<8x32xf32>
    %39 = tpu.matmul %38, %32, %cst_25 {dimension_numbers = #tpu.dot_dimension_numbers<[1], [0], [0], [1], [0, 0, 1, 1], [], []>} : vector<8x32xf32>, vector<32x32xf32>, vector<8x32xf32> -> vector<8x32xf32>
    %40 = vector.broadcast %33 : vector<1x32xf32> to vector<8x32xf32>
    %41 = arith.addf %39, %40 : vector<8x32xf32>
    %cst_26 = arith.constant dense<0.000000e+00> : vector<8x4xf32>
    %42 = tpu.matmul %41, %20, %cst_26 {dimension_numbers = #tpu.dot_dimension_numbers<[1], [0], [0], [1], [0, 0, 1, 1], [], []>} : vector<8x32xf32>, vector<32x4xf32>, vector<8x4xf32> -> vector<8x4xf32>
    %c0_27 = arith.constant 0 : index
    %c0_28 = arith.constant 0 : index
    %43 = vector.load %arg4[%c0_27, %c0_28] : memref<8x8xf32, #tpu.memory_space<vmem>>, vector<8x8xf32>
    %c0_29 = arith.constant 0 : index
    %c0_30 = arith.constant 0 : index
    %44 = vector.load %arg5[%c0_29, %c0_30] : memref<8x8xf32, #tpu.memory_space<vmem>>, vector<8x8xf32>
    %c0_31 = arith.constant 0 : index
    %c0_32 = arith.constant 0 : index
    %45 = vector.load %arg28[%c0_31, %c0_32] : memref<8x132xf32, #tpu.memory_space<vmem>>, vector<8x132xf32>
    %cst_33 = arith.constant dense<0.000000e+00> : vector<8x132xf32>
    %46 = tpu.matmul %44, %45, %cst_33 {dimension_numbers = #tpu.dot_dimension_numbers<[1], [0], [0], [1], [0, 0, 1, 1], [], []>} : vector<8x8xf32>, vector<8x132xf32>, vector<8x132xf32> -> vector<8x132xf32>
    %47 = vector.extract_strided_slice %46 {offsets = [0, 0], sizes = [8, 128], strides = [1, 1]} : vector<8x132xf32> to vector<8x128xf32>
    %48 = vector.extract_strided_slice %46 {offsets = [0, 128], sizes = [8, 4], strides = [1, 1]} : vector<8x132xf32> to vector<8x4xf32>
    %c0_34 = arith.constant 0 : index
    %c0_35 = arith.constant 0 : index
    %49 = vector.load %arg29[%c0_34, %c0_35] : memref<8x4xf32, #tpu.memory_space<vmem>>, vector<8x4xf32>
    %cst_36 = arith.constant dense<0.000000e+00> : vector<8x4xf32>
    %50 = tpu.matmul %43, %49, %cst_36 {dimension_numbers = #tpu.dot_dimension_numbers<[1], [0], [0], [1], [0, 0, 1, 1], [], []>} : vector<8x8xf32>, vector<8x4xf32>, vector<8x4xf32> -> vector<8x4xf32>
    %51 = arith.addf %50, %48 : vector<8x4xf32>
    %52 = arith.addf %51, %42 : vector<8x4xf32>
    %cst_37 = arith.constant 0.000000e+00 : f32
    %53 = vector.broadcast %cst_37 : f32 to vector<8x4xf32>
    %54 = arith.cmpf ogt, %52, %53 : vector<8x4xf32>
    %cst_38 = arith.constant 0.00999999977 : f32
    %55 = vector.broadcast %cst_38 : f32 to vector<8x4xf32>
    %56 = arith.mulf %55, %52 : vector<8x4xf32>
    %57 = arith.select %54, %52, %56 : vector<8x4xi1>, vector<8x4xf32>
    %c0_39 = arith.constant 0 : index
    %c0_40 = arith.constant 0 : index
    %58 = vector.load %arg32[%c0_39, %c0_40] : memref<1x4xf32, #tpu.memory_space<vmem>>, vector<1x4xf32>
    %cst_41 = arith.constant dense<0xFF800000> : vector<4xf32>
    %59 = vector.multi_reduction <maximumf>, %57, %cst_41 [0] : vector<8x4xf32> to vector<4xf32>
    %60 = vector.shape_cast %59 : vector<4xf32> to vector<1x4xf32>
    %61 = arith.maximumf %58, %60 : vector<1x4xf32>
    %62 = arith.subf %58, %61 : vector<1x4xf32>
    %63 = math.exp %62 : vector<1x4xf32>
    %c0_42 = arith.constant 0 : index
    %c0_43 = arith.constant 0 : index
    %64 = vector.load %arg31[%c0_42, %c0_43] : memref<8x4xf32, #tpu.memory_space<vmem>>, vector<8x4xf32>
    %65 = vector.broadcast %63 : vector<1x4xf32> to vector<8x4xf32>
    %66 = arith.mulf %64, %65 : vector<8x4xf32>
    %c0_44 = arith.constant 0 : index
    %c0_45 = arith.constant 0 : index
    %67 = vector.load %arg31[%c0_44, %c0_45] : memref<8x4xf32, #tpu.memory_space<vmem>>, vector<8x4xf32>
    tpu.vector_store %arg31[%c0_44, %c0_45], %66 {strides = array<i32>} : memref<8x4xf32, #tpu.memory_space<vmem>>, vector<8x4xf32>,
    %c0_46 = arith.constant 0 : index
    %c0_47 = arith.constant 0 : index
    %68 = vector.load %arg30[%c0_46, %c0_47] : memref<8x128xf32, #tpu.memory_space<vmem>>, vector<8x128xf32>
    %cst_48 = arith.constant dense<0.000000e+00> : vector<1x128xf32>
    %69 = tpu.matmul %63, %28, %cst_48 {dimension_numbers = #tpu.dot_dimension_numbers<[1], [0], [0], [1], [0, 0, 1, 1], [], []>} : vector<1x4xf32>, vector<4x128xf32>, vector<1x128xf32> -> vector<1x128xf32>
    %70 = vector.broadcast %69 : vector<1x128xf32> to vector<8x128xf32>
    %71 = arith.mulf %68, %70 : vector<8x128xf32>
    %c0_49 = arith.constant 0 : index
    %c0_50 = arith.constant 0 : index
    %72 = vector.load %arg30[%c0_49, %c0_50] : memref<8x128xf32, #tpu.memory_space<vmem>>, vector<8x128xf32>
    tpu.vector_store %arg30[%c0_49, %c0_50], %71 {strides = array<i32>} : memref<8x128xf32, #tpu.memory_space<vmem>>, vector<8x128xf32>,
    %c0_51 = arith.constant 0 : index
    %c0_52 = arith.constant 0 : index
    %73 = vector.load %arg32[%c0_51, %c0_52] : memref<1x4xf32, #tpu.memory_space<vmem>>, vector<1x4xf32>
    tpu.vector_store %arg32[%c0_51, %c0_52], %61 {strides = array<i32>} : memref<1x4xf32, #tpu.memory_space<vmem>>, vector<1x4xf32>,
    %74 = vector.broadcast %61 : vector<1x4xf32> to vector<8x4xf32>
    %75 = arith.subf %57, %74 : vector<8x4xf32>
    %76 = math.exp %75 : vector<8x4xf32>
    %cst_53 = arith.constant dense<0.000000e+00> : vector<8x128xf32>
    %77 = tpu.matmul %76, %28, %cst_53 {dimension_numbers = #tpu.dot_dimension_numbers<[1], [0], [0], [1], [0, 0, 1, 1], [], []>} : vector<8x4xf32>, vector<4x128xf32>, vector<8x128xf32> -> vector<8x128xf32>
    %c0_54 = arith.constant 0 : index
    %c0_55 = arith.constant 0 : index
    %78 = vector.load %arg31[%c0_54, %c0_55] : memref<8x4xf32, #tpu.memory_space<vmem>>, vector<8x4xf32>
    %cst_56 = arith.constant dense<0.000000e+00> : vector<8x4xf32>
    %79 = tpu.matmul %43, %76, %cst_56 {dimension_numbers = #tpu.dot_dimension_numbers<[0], [0], [1], [1], [0, 1, 1, 1], [], []>} : vector<8x8xf32>, vector<8x4xf32>, vector<8x4xf32> -> vector<8x4xf32>
    %80 = arith.addf %78, %79 : vector<8x4xf32>
    %c0_57 = arith.constant 0 : index
    %c0_58 = arith.constant 0 : index
    %81 = vector.load %arg31[%c0_57, %c0_58] : memref<8x4xf32, #tpu.memory_space<vmem>>, vector<8x4xf32>
    tpu.vector_store %arg31[%c0_57, %c0_58], %80 {strides = array<i32>} : memref<8x4xf32, #tpu.memory_space<vmem>>, vector<8x4xf32>,
    %c0_59 = arith.constant 0 : index
    %c0_60 = arith.constant 0 : index
    %82 = vector.load %arg30[%c0_59, %c0_60] : memref<8x128xf32, #tpu.memory_space<vmem>>, vector<8x128xf32>
    %83 = arith.mulf %47, %77 : vector<8x128xf32>
    %cst_61 = arith.constant dense<0.000000e+00> : vector<8x128xf32>
    %84 = tpu.matmul %43, %83, %cst_61 {dimension_numbers = #tpu.dot_dimension_numbers<[0], [0], [1], [1], [0, 1, 1, 1], [], []>} : vector<8x8xf32>, vector<8x128xf32>, vector<8x128xf32> -> vector<8x128xf32>
    %85 = arith.addf %82, %84 : vector<8x128xf32>
    %c0_62 = arith.constant 0 : index
    %c0_63 = arith.constant 0 : index
    %86 = vector.load %arg30[%c0_62, %c0_63] : memref<8x128xf32, #tpu.memory_space<vmem>>, vector<8x128xf32>
    tpu.vector_store %arg30[%c0_62, %c0_63], %85 {strides = array<i32>} : memref<8x128xf32, #tpu.memory_space<vmem>>, vector<8x128xf32>,
    %c0_i32_64 = arith.constant 0 : i32
    %87 = arith.cmpi eq, %arg0, %c0_i32_64 : i32
    %c1_i32_65 = arith.constant 1 : i32
    %88 = arith.cmpi eq, %arg1, %c1_i32_65 : i32
    %89 = arith.andi %87, %88 : i1
    %90 = arith.extui %89 : i1 to i32
    %c0_i32_66 = arith.constant 0 : i32
    %91 = arith.cmpi ne, %90, %c0_i32_66 : i32
    scf.if %91 {
      %c0_70 = arith.constant 0 : index
      %c0_71 = arith.constant 0 : index
      %97 = vector.load %arg31[%c0_70, %c0_71] : memref<8x4xf32, #tpu.memory_space<vmem>>, vector<8x4xf32>
      %cst_72 = arith.constant 1.000000e-16 : f32
      %98 = vector.broadcast %cst_72 : f32 to vector<8x4xf32>
      %99 = arith.addf %97, %98 : vector<8x4xf32>
      %cst_73 = arith.constant 1.000000e+00 : f32
      %100 = vector.broadcast %cst_73 : f32 to vector<8x4xf32>
      %101 = arith.divf %100, %99 : vector<8x4xf32>
      %c0_74 = arith.constant 0 : index
      %c0_75 = arith.constant 0 : index
      %102 = vector.load %arg30[%c0_74, %c0_75] : memref<8x128xf32, #tpu.memory_space<vmem>>, vector<8x128xf32>
      %cst_76 = arith.constant dense<0.000000e+00> : vector<8x128xf32>
      %103 = tpu.matmul %101, %28, %cst_76 {dimension_numbers = #tpu.dot_dimension_numbers<[1], [0], [0], [1], [0, 0, 1, 1], [], []>} : vector<8x4xf32>, vector<4x128xf32>, vector<8x128xf32> -> vector<8x128xf32>
      %104 = arith.mulf %102, %103 : vector<8x128xf32>
      %cst_77 = arith.constant 0.000000e+00 : f32
      %105 = vector.broadcast %cst_77 : f32 to vector<8x128xf32>
      %106 = arith.cmpf ogt, %104, %105 : vector<8x128xf32>
      %cst_78 = arith.constant 0.000000e+00 : f32
      %107 = vector.broadcast %cst_78 : f32 to vector<8x128xf32>
      %108 = arith.minimumf %104, %107 : vector<8x128xf32>
      %109 = math.exp %108 : vector<8x128xf32>
      %cst_79 = arith.constant 1.000000e+00 : f32
      %110 = vector.broadcast %cst_79 : f32 to vector<8x128xf32>
      %111 = arith.subf %109, %110 : vector<8x128xf32>
      %112 = arith.select %106, %104, %111 : vector<8x128xi1>, vector<8x128xf32>
      %cst_80 = arith.constant 0.000000e+00 : f32
      %113 = vector.broadcast %cst_80 : f32 to vector<8x128xf32>
      %114 = arith.cmpf ogt, %112, %113 : vector<8x128xf32>
      %cst_81 = arith.constant 0.000000e+00 : f32
      %115 = vector.broadcast %cst_81 : f32 to vector<8x128xf32>
      %116 = arith.minimumf %112, %115 : vector<8x128xf32>
      %117 = math.exp %116 : vector<8x128xf32>
      %cst_82 = arith.constant 1.000000e+00 : f32
      %118 = vector.broadcast %cst_82 : f32 to vector<8x128xf32>
      %119 = arith.subf %117, %118 : vector<8x128xf32>
      %120 = arith.select %114, %112, %119 : vector<8x128xi1>, vector<8x128xf32>
      %c0_83 = arith.constant 0 : index
      %c0_84 = arith.constant 0 : index
      %121 = vector.load %arg27[%c0_83, %c0_84] : memref<8x128xf32, #tpu.memory_space<vmem>>, vector<8x128xf32>
      tpu.vector_store %arg27[%c0_83, %c0_84], %120 {strides = array<i32>} : memref<8x128xf32, #tpu.memory_space<vmem>>, vector<8x128xf32>,
    } else {
    }
    %c1_i32_67 = arith.constant 1 : i32
    %92 = arith.cmpi eq, %arg0, %c1_i32_67 : i32
    %c1_i32_68 = arith.constant 1 : i32
    %93 = arith.cmpi eq, %arg1, %c1_i32_68 : i32
    %94 = arith.andi %92, %93 : i1
    %95 = arith.extui %94 : i1 to i32
    %c0_i32_69 = arith.constant 0 : i32
    %96 = arith.cmpi ne, %95, %c0_i32_69 : i32
    scf.if %96 {
      %c0_70 = arith.constant 0 : index
      %c0_71 = arith.constant 0 : index
      %97 = vector.load %arg31[%c0_70, %c0_71] : memref<8x4xf32, #tpu.memory_space<vmem>>, vector<8x4xf32>
      %cst_72 = arith.constant 1.000000e-16 : f32
      %98 = vector.broadcast %cst_72 : f32 to vector<8x4xf32>
      %99 = arith.addf %97, %98 : vector<8x4xf32>
      %cst_73 = arith.constant 1.000000e+00 : f32
      %100 = vector.broadcast %cst_73 : f32 to vector<8x4xf32>
      %101 = arith.divf %100, %99 : vector<8x4xf32>
      %c0_74 = arith.constant 0 : index
      %c0_75 = arith.constant 0 : index
      %102 = vector.load %arg30[%c0_74, %c0_75] : memref<8x128xf32, #tpu.memory_space<vmem>>, vector<8x128xf32>
      %cst_76 = arith.constant dense<0.000000e+00> : vector<8x128xf32>
      %103 = tpu.matmul %101, %28, %cst_76 {dimension_numbers = #tpu.dot_dimension_numbers<[1], [0], [0], [1], [0, 0, 1, 1], [], []>} : vector<8x4xf32>, vector<4x128xf32>, vector<8x128xf32> -> vector<8x128xf32>
      %104 = arith.mulf %102, %103 : vector<8x128xf32>
      %cst_77 = arith.constant 0.000000e+00 : f32
      %105 = vector.broadcast %cst_77 : f32 to vector<8x128xf32>
      %106 = arith.cmpf ogt, %104, %105 : vector<8x128xf32>
      %cst_78 = arith.constant 0.000000e+00 : f32
      %107 = vector.broadcast %cst_78 : f32 to vector<8x128xf32>
      %108 = arith.minimumf %104, %107 : vector<8x128xf32>
      %109 = math.exp %108 : vector<8x128xf32>
      %cst_79 = arith.constant 1.000000e+00 : f32
      %110 = vector.broadcast %cst_79 : f32 to vector<8x128xf32>
      %111 = arith.subf %109, %110 : vector<8x128xf32>
      %112 = arith.select %106, %104, %111 : vector<8x128xi1>, vector<8x128xf32>
      %c0_80 = arith.constant 0 : index
      %c0_81 = arith.constant 0 : index
      %113 = vector.load %arg24[%c0_80, %c0_81] : memref<1x128xf32, #tpu.memory_space<vmem>>, vector<1x128xf32>
      %114 = vector.broadcast %113 : vector<1x128xf32> to vector<8x128xf32>
      %115 = arith.mulf %112, %114 : vector<8x128xf32>
      %cst_82 = arith.constant 1.000000e+00 : f32
      %116 = vector.broadcast %cst_82 : f32 to vector<1x128xf32>
      %117 = arith.subf %116, %113 : vector<1x128xf32>
      %cst_83 = arith.constant -1.000000e+30 : f32
      %118 = vector.broadcast %cst_83 : f32 to vector<1x128xf32>
      %119 = arith.mulf %117, %118 : vector<1x128xf32>
      %120 = vector.broadcast %119 : vector<1x128xf32> to vector<8x128xf32>
      %121 = arith.addf %115, %120 : vector<8x128xf32>
      %cst_84 = arith.constant dense<0xFF800000> : vector<8xf32>
      %122 = vector.multi_reduction <maximumf>, %121, %cst_84 [1] : vector<8x128xf32> to vector<8xf32>
      %123 = vector.shape_cast %122 : vector<8xf32> to vector<8x1xf32>
      %124 = vector.broadcast %123 : vector<8x1xf32> to vector<8x128xf32>
      %125 = arith.subf %121, %124 : vector<8x128xf32>
      %126 = math.exp %125 : vector<8x128xf32>
      %cst_85 = arith.constant dense<0.000000e+00> : vector<8xf32>
      %127 = vector.multi_reduction <add>, %126, %cst_85 [1] : vector<8x128xf32> to vector<8xf32>
      %128 = vector.shape_cast %127 : vector<8xf32> to vector<8x1xf32>
      %129 = math.log %128 : vector<8x1xf32>
      %130 = arith.addf %123, %129 : vector<8x1xf32>
      %131 = vector.broadcast %130 : vector<8x1xf32> to vector<8x128xf32>
      %132 = arith.subf %112, %131 : vector<8x128xf32>
      %c0_86 = arith.constant 0 : index
      %c0_87 = arith.constant 0 : index
      %133 = vector.load %arg25[%c0_86, %c0_87] : memref<8x128xf32, #tpu.memory_space<vmem>>, vector<8x128xf32>
      tpu.vector_store %arg25[%c0_86, %c0_87], %132 {strides = array<i32>} : memref<8x128xf32, #tpu.memory_space<vmem>>, vector<8x128xf32>,
    } else {
    }
    return
  }
  func.func @transform_0(%arg0: i32, %arg1: i32) -> (i32, i32) {
    %c0_i32 = arith.constant 0 : i32
    %c0_i32_0 = arith.constant 0 : i32
    %c0_i32_1 = arith.constant 0 : i32
    return %c0_i32, %c0_i32_0 : i32, i32
  }
  func.func @transform_1(%arg0: i32, %arg1: i32) -> (i32, i32) {
    %c0_i32 = arith.constant 0 : i32
    %c0_i32_0 = arith.constant 0 : i32
    return %arg1, %c0_i32 : i32, i32
  }
  func.func @transform_2(%arg0: i32, %arg1: i32) -> (i32, i32) {
    %c0_i32 = arith.constant 0 : i32
    %c0_i32_0 = arith.constant 0 : i32
    return %arg1, %c0_i32 : i32, i32
  }
  func.func @transform_3(%arg0: i32, %arg1: i32) -> (i32, i32) {
    %c0_i32 = arith.constant 0 : i32
    %c0_i32_0 = arith.constant 0 : i32
    return %arg1, %c0_i32 : i32, i32
  }
  func.func @transform_4(%arg0: i32, %arg1: i32) -> (i32, i32) {
    %c0_i32 = arith.constant 0 : i32
    %c0_i32_0 = arith.constant 0 : i32
    %c0_i32_1 = arith.constant 0 : i32
    return %c0_i32, %c0_i32_0 : i32, i32
  }
  func.func @transform_5(%arg0: i32, %arg1: i32) -> (i32, i32) {
    %c0_i32 = arith.constant 0 : i32
    %c0_i32_0 = arith.constant 0 : i32
    %c0_i32_1 = arith.constant 0 : i32
    return %c0_i32, %c0_i32_0 : i32, i32
  }
  func.func @transform_6(%arg0: i32, %arg1: i32) -> (i32, i32) {
    %c0_i32 = arith.constant 0 : i32
    %c0_i32_0 = arith.constant 0 : i32
    %c0_i32_1 = arith.constant 0 : i32
    return %c0_i32, %c0_i32_0 : i32, i32
  }
  func.func @transform_7(%arg0: i32, %arg1: i32) -> (i32, i32) {
    %c0_i32 = arith.constant 0 : i32
    %c0_i32_0 = arith.constant 0 : i32
    %c0_i32_1 = arith.constant 0 : i32
    return %c0_i32, %c0_i32_0 : i32, i32
  }
  func.func @transform_8(%arg0: i32, %arg1: i32) -> (i32, i32) {
    %c0_i32 = arith.constant 0 : i32
    %c0_i32_0 = arith.constant 0 : i32
    %c0_i32_1 = arith.constant 0 : i32
    return %c0_i32, %c0_i32_0 : i32, i32
  }
  func.func @transform_9(%arg0: i32, %arg1: i32) -> (i32, i32) {
    %c0_i32 = arith.constant 0 : i32
    %c0_i32_0 = arith.constant 0 : i32
    %c0_i32_1 = arith.constant 0 : i32
    return %c0_i32, %c0_i32_0 : i32, i32
  }
  func.func @transform_10(%arg0: i32, %arg1: i32) -> (i32, i32) {
    %c0_i32 = arith.constant 0 : i32
    %c0_i32_0 = arith.constant 0 : i32
    %c0_i32_1 = arith.constant 0 : i32
    return %c0_i32, %c0_i32_0 : i32, i32
  }
  func.func @transform_11(%arg0: i32, %arg1: i32) -> (i32, i32) {
    %c0_i32 = arith.constant 0 : i32
    %c0_i32_0 = arith.constant 0 : i32
    %c0_i32_1 = arith.constant 0 : i32
    return %c0_i32, %c0_i32_0 : i32, i32
  }
  func.func @transform_12(%arg0: i32, %arg1: i32) -> (i32, i32) {
    %c0_i32 = arith.constant 0 : i32
    %c0_i32_0 = arith.constant 0 : i32
    %c0_i32_1 = arith.constant 0 : i32
    return %c0_i32, %c0_i32_0 : i32, i32
  }
  func.func @transform_13(%arg0: i32, %arg1: i32) -> (i32, i32) {
    %c0_i32 = arith.constant 0 : i32
    %c0_i32_0 = arith.constant 0 : i32
    %c0_i32_1 = arith.constant 0 : i32
    return %c0_i32, %c0_i32_0 : i32, i32
  }
  func.func @transform_14(%arg0: i32, %arg1: i32) -> (i32, i32) {
    %c0_i32 = arith.constant 0 : i32
    %c0_i32_0 = arith.constant 0 : i32
    %c0_i32_1 = arith.constant 0 : i32
    return %c0_i32, %c0_i32_0 : i32, i32
  }
  func.func @transform_15(%arg0: i32, %arg1: i32) -> (i32, i32) {
    %c0_i32 = arith.constant 0 : i32
    %c0_i32_0 = arith.constant 0 : i32
    %c0_i32_1 = arith.constant 0 : i32
    return %c0_i32, %c0_i32_0 : i32, i32
  }
  func.func @transform_16(%arg0: i32, %arg1: i32) -> (i32, i32) {
    %c0_i32 = arith.constant 0 : i32
    %c0_i32_0 = arith.constant 0 : i32
    %c0_i32_1 = arith.constant 0 : i32
    return %c0_i32, %c0_i32_0 : i32, i32
  }
  func.func @transform_17(%arg0: i32, %arg1: i32) -> (i32, i32) {
    %c0_i32 = arith.constant 0 : i32
    %c0_i32_0 = arith.constant 0 : i32
    %c0_i32_1 = arith.constant 0 : i32
    return %c0_i32, %c0_i32_0 : i32, i32
  }
  func.func @transform_18(%arg0: i32, %arg1: i32) -> (i32, i32) {
    %c0_i32 = arith.constant 0 : i32
    %c0_i32_0 = arith.constant 0 : i32
    %c0_i32_1 = arith.constant 0 : i32
    return %c0_i32, %c0_i32_0 : i32, i32
  }
  func.func @transform_19(%arg0: i32, %arg1: i32) -> (i32, i32) {
    %c0_i32 = arith.constant 0 : i32
    %c0_i32_0 = arith.constant 0 : i32
    %c0_i32_1 = arith.constant 0 : i32
    return %c0_i32, %c0_i32_0 : i32, i32
  }
  func.func @transform_20(%arg0: i32, %arg1: i32) -> (i32, i32) {
    %c0_i32 = arith.constant 0 : i32
    %c0_i32_0 = arith.constant 0 : i32
    %c0_i32_1 = arith.constant 0 : i32
    return %c0_i32, %c0_i32_0 : i32, i32
  }
  func.func @transform_21(%arg0: i32, %arg1: i32) -> (i32, i32) {
    %c0_i32 = arith.constant 0 : i32
    %c0_i32_0 = arith.constant 0 : i32
    %c0_i32_1 = arith.constant 0 : i32
    return %c0_i32, %c0_i32_0 : i32, i32
  }
  func.func @transform_22(%arg0: i32, %arg1: i32) -> (i32, i32) {
    %c0_i32 = arith.constant 0 : i32
    %c0_i32_0 = arith.constant 0 : i32
    %c0_i32_1 = arith.constant 0 : i32
    return %c0_i32, %c0_i32_0 : i32, i32
  }
  func.func @transform_23(%arg0: i32, %arg1: i32) -> (i32, i32) {
    %c0_i32 = arith.constant 0 : i32
    %c0_i32_0 = arith.constant 0 : i32
    %c0_i32_1 = arith.constant 0 : i32
    return %c0_i32, %c0_i32_0 : i32, i32
  }
}

</mosaic_0001>

<llo_original>
// kernel: aa_gat_forward.1
$region0: #{aa_gat_forward.1}
  #allocation0 [shape = 'u32[]', space=smem, size = 0x4, offset = 0x4, fixed_abs, tag = 'smem constant byte address 0x4 - core index']
  #allocation1 [shape = 'u32[72,128]{1,0:T(1,128)}', space=vmem, size = 0x9000, scoped, tag = 'internal scratch']
  #allocation2 [shape = 'f32[8,32]{1,0:T(8,128)}', space=vmem, size = 0x1000, scoped, tag = 'scratch operand']
  #allocation3 [shape = 'f32[8,128]{1,0:T(8,128)}', space=vmem, size = 0x1000, scoped, tag = 'scratch operand']
  #allocation4 [shape = 'f32[8,132]{1,0:T(8,128)}', space=vmem, size = 0x2000, scoped, tag = 'scratch operand']
  #allocation5 [shape = 'f32[8,4]{1,0:T(8,128)}', space=vmem, size = 0x1000, scoped, tag = 'scratch operand']
  #allocation6 [shape = 'f32[8,128]{1,0:T(8,128)}', space=vmem, size = 0x1000, scoped, tag = 'scratch operand']
  #allocation7 [shape = 'f32[8,4]{1,0:T(8,128)}', space=vmem, size = 0x1000, scoped, tag = 'scratch operand']
  #allocation8 [shape = 'f32[1,4]{1,0:T(1,128)}', space=vmem, size = 0x200, scoped, tag = 'scratch operand']
  %s0 = inlined_call_operand.vmem [shape: f32[8,8], index: 0, kind: input, shape index: {}]
  %s1 = inlined_call_operand.vmem [shape: f32[16,8], index: 1, kind: input, shape index: {}]
  %s2 = inlined_call_operand.vmem [shape: f32[16,8], index: 2, kind: input, shape index: {}]
  %s3 = inlined_call_operand.vmem [shape: f32[16,8], index: 3, kind: input, shape index: {}]
  %s4 = inlined_call_operand.vmem [shape: f32[8,32], index: 4, kind: input, shape index: {}]
  %s5 = inlined_call_operand.vmem [shape: f32[1,32], index: 5, kind: input, shape index: {}]
  %s6 = inlined_call_operand.vmem [shape: f32[32,32], index: 6, kind: input, shape index: {}]
  %s7 = inlined_call_operand.vmem [shape: f32[1,32], index: 7, kind: input, shape index: {}]
  %s8 = inlined_call_operand.vmem [shape: f32[8,32], index: 8, kind: input, shape index: {}]
  %s9 = inlined_call_operand.vmem [shape: f32[1,32], index: 9, kind: input, shape index: {}]
  %s10 = inlined_call_operand.vmem [shape: f32[32,32], index: 10, kind: input, shape index: {}]
  %s11 = inlined_call_operand.vmem [shape: f32[1,32], index: 11, kind: input, shape index: {}]
  %s12 = inlined_call_operand.vmem [shape: f32[32,128], index: 12, kind: input, shape index: {}]
  %s13 = inlined_call_operand.vmem [shape: f32[128,4], index: 13, kind: input, shape index: {}]
  %s14 = inlined_call_operand.vmem [shape: f32[128,4], index: 14, kind: input, shape index: {}]
  %s15 = inlined_call_operand.vmem [shape: f32[32,4], index: 15, kind: input, shape index: {}]
  %s16 = inlined_call_operand.vmem [shape: f32[4,128], index: 16, kind: input, shape index: {}]
  %s17 = inlined_call_operand.vmem [shape: f32[128,128], index: 17, kind: input, shape index: {}]
  %s18 = inlined_call_operand.vmem [shape: f32[128,4], index: 18, kind: input, shape index: {}]
  %s19 = inlined_call_operand.vmem [shape: f32[128,4], index: 19, kind: input, shape index: {}]
  %s20 = inlined_call_operand.vmem [shape: f32[32,4], index: 20, kind: input, shape index: {}]
  %s21 = inlined_call_operand.vmem [shape: f32[4,128], index: 21, kind: input, shape index: {}]
  %s22 = inlined_call_operand.vmem [shape: f32[1,128], index: 22, kind: input, shape index: {}]
  %s23 = inlined_call_operand.hbm [shape: f32[8,128], index: 23, kind: output, shape index: {}]
  %s24 = sld [smem:[#allocation0]]
  $region141: #{aa_gat_forward.1} parent=0
    _
  %s26 = ssub.s32 1, %s24
  %s27 = scalar_select 0, %s26, %s24
  $region1: #{aa_gat_forward.1} parent=0
    #allocation9 [shape = 'u8[4096]{0}', space=vmem, size = 0x1000, scoped, tag = 'output window, operand 0, single buffered']
    #allocation10 [shape = 's32[2]{0}', space=sflag, size = 0x8, scoped, tag = 'scoped memory for aa_gat_forward.1']
    %28 = vsyncpa [#allocation10], 0
    loop: start=0, step=1, limit=6
    $region2: #{aa_gat_forward.1} parent=1 // loop_pre_header
      _
    $region3: #{aa_gat_forward.1} parent=1 // loop_header
      %s30 = sphi 0, %s34
      %p31 = scmp.ge.s32.totalorder %s30, 6
      %s37 = sphi 0, %s49
      %s38 = sphi 0, %s45
      %s39 = sphi 0, %s37
      %s40 = sphi 0, %s38
      %s41 = sphi 0, %s39
      %s42 = sphi 0, %s40
      %s50 = sphi 0, %s50
      %s52 = sphi 0, %s50
      %s53 = sphi 0, %s52
      %s67 = sphi 0, %s53
      %s73 = sphi 0, %s75
      %s76 = sphi 0, %s73
      %s77 = sphi 0, %s76
      %s93 = sphi 0, %s77
      %s99 = sphi 0, %s101
      %s102 = sphi 0, %s99
      %s103 = sphi 0, %s102
      %s119 = sphi 0, %s103
      %s125 = sphi 0, %s127
      %s128 = sphi 0, %s125
      %s129 = sphi 0, %s128
      %s145 = sphi 0, %s129
      %s149 = sphi 0, %s149
      %s151 = sphi 0, %s149
      %s152 = sphi 0, %s151
      %s166 = sphi 0, %s152
      %s170 = sphi 0, %s170
      %s172 = sphi 0, %s170
      %s173 = sphi 0, %s172
      %s187 = sphi 0, %s173
      %s191 = sphi 0, %s191
      %s193 = sphi 0, %s191
      %s194 = sphi 0, %s193
      %s208 = sphi 0, %s194
      %s212 = sphi 0, %s212
      %s214 = sphi 0, %s212
      %s215 = sphi 0, %s214
      %s229 = sphi 0, %s215
      %s233 = sphi 0, %s233
      %s235 = sphi 0, %s233
      %s236 = sphi 0, %s235
      %s250 = sphi 0, %s236
      %s254 = sphi 0, %s254
      %s256 = sphi 0, %s254
      %s257 = sphi 0, %s256
      %s271 = sphi 0, %s257
      %s275 = sphi 0, %s275
      %s277 = sphi 0, %s275
      %s278 = sphi 0, %s277
      %s292 = sphi 0, %s278
      %s296 = sphi 0, %s296
      %s298 = sphi 0, %s296
      %s299 = sphi 0, %s298
      %s313 = sphi 0, %s299
      %s317 = sphi 0, %s317
      %s319 = sphi 0, %s317
      %s320 = sphi 0, %s319
      %s334 = sphi 0, %s320
      %s338 = sphi 0, %s338
      %s340 = sphi 0, %s338
      %s341 = sphi 0, %s340
      %s355 = sphi 0, %s341
      %s359 = sphi 0, %s359
      %s361 = sphi 0, %s359
      %s362 = sphi 0, %s361
      %s376 = sphi 0, %s362
      %s380 = sphi 0, %s380
      %s382 = sphi 0, %s380
      %s383 = sphi 0, %s382
      %s397 = sphi 0, %s383
      %s401 = sphi 0, %s401
      %s403 = sphi 0, %s401
      %s404 = sphi 0, %s403
      %s418 = sphi 0, %s404
      %s422 = sphi 0, %s422
      %s424 = sphi 0, %s422
      %s425 = sphi 0, %s424
      %s439 = sphi 0, %s425
      %s443 = sphi 0, %s443
      %s445 = sphi 0, %s443
      %s446 = sphi 0, %s445
      %s460 = sphi 0, %s446
      %s464 = sphi 0, %s464
      %s466 = sphi 0, %s464
      %s467 = sphi 0, %s466
      %s481 = sphi 0, %s467
      %s485 = sphi 0, %s485
      %s487 = sphi 0, %s485
      %s488 = sphi 0, %s487
      %s502 = sphi 0, %s488
      %s506 = sphi 0, %s506
      %s508 = sphi 0, %s506
      %s509 = sphi 0, %s508
      %s523 = sphi 0, %s509
      %s527 = sphi 0, %s527
      %s529 = sphi 0, %s527
      %s530 = sphi 0, %s529
      %s544 = sphi 0, %s530
      %s548 = sphi 0, %s548
      %s550 = sphi 0, %s548
      %s551 = sphi 0, %s550
      %s565 = sphi 0, %s551
    $region4: #{aa_gat_forward.1} parent=1 // loop_header_branch
      %33 = sbr.rel (%p31) target = $region8
    $region5: #{aa_gat_forward.1} parent=1 // loop_body
      %s35 = ssub.s32 %s30, 1
      %s36 = ssub.s32 %s30, 2
      %s43 = sadd.s32 1, %s38
      %p44 = scmp.ge.s32.totalorder %s43, 2
      %s45 = scalar_select %p44, 0, %s43
      %s46 = sadd.s32 1, %s37
      %s47 = scalar_select %p44, %s46, %s37
      %p48 = scmp.ge.s32.totalorder %s47, 2
      %s49 = scalar_select %p48, 0, %s47
      %s51 = sadd.s32 %s50, 1
      %p54 = scmp.eq.s32.totalorder %s30, 3
      %p55 = scmp.ne.s32.totalorder %s50, %s52
      %p56 = scmp.eq.s32.totalorder %s30, 0
      %p57 = por %p55, %p56
      %p58 = scmp.ne.s32.totalorder %s50, %s52
      %p59 = scmp.eq.s32.totalorder %s35, 3
      %p60 = por %p58, %p59
      %p61 = scmp.ne.s32.totalorder %s52, %s53
      %p62 = scmp.eq.s32.totalorder %s35, 0
      %p63 = por %p61, %p62
      %p64 = scmp.ne.s32.totalorder %s52, %s53
      %p65 = scmp.eq.s32.totalorder %s36, 3
      %p66 = por %p64, %p65
      %p68 = scmp.ne.s32.totalorder %s53, %s67
      %p69 = scmp.eq.s32.totalorder %s36, 0
      %p70 = por %p68, %p69
      %s71 = ssub.s32 %s38, %s45
      %p72 = scmp.eq.s32.totalorder %s71, 0
      %s74 = sadd.s32 %s73, 1
      %s75 = scalar_select %p72, %s73, %s74
      %p78 = pneg %p72
      %p79 = scmp.eq.s32.totalorder %s30, 3
      %p80 = por %p78, %p79
      %p81 = scmp.ne.s32.totalorder %s73, %s76
      %p82 = scmp.eq.s32.totalorder %s30, 0
      %p83 = por %p81, %p82
      %p84 = scmp.ne.s32.totalorder %s73, %s76
      %p85 = scmp.eq.s32.totalorder %s35, 3
      %p86 = por %p84, %p85
      %p87 = scmp.ne.s32.totalorder %s76, %s77
      %p88 = scmp.eq.s32.totalorder %s35, 0
      %p89 = por %p87, %p88
      %p90 = scmp.ne.s32.totalorder %s76, %s77
      %p91 = scmp.eq.s32.totalorder %s36, 3
      %p92 = por %p90, %p91
      %p94 = scmp.ne.s32.totalorder %s77, %s93
      %p95 = scmp.eq.s32.totalorder %s36, 0
      %p96 = por %p94, %p95
      %s97 = ssub.s32 %s38, %s45
      %p98 = scmp.eq.s32.totalorder %s97, 0
      %s100 = sadd.s32 %s99, 1
      %s101 = scalar_select %p98, %s99, %s100
      %p104 = pneg %p98
      %p105 = scmp.eq.s32.totalorder %s30, 3
      %p106 = por %p104, %p105
      %p107 = scmp.ne.s32.totalorder %s99, %s102
      %p108 = scmp.eq.s32.totalorder %s30, 0
      %p109 = por %p107, %p108
      %p110 = scmp.ne.s32.totalorder %s99, %s102
      %p111 = scmp.eq.s32.totalorder %s35, 3
      %p112 = por %p110, %p111
      %p113 = scmp.ne.s32.totalorder %s102, %s103
      %p114 = scmp.eq.s32.totalorder %s35, 0
      %p115 = por %p113, %p114
      %p116 = scmp.ne.s32.totalorder %s102, %s103
      %p117 = scmp.eq.s32.totalorder %s36, 3
      %p118 = por %p116, %p117
      %p120 = scmp.ne.s32.totalorder %s103, %s119
      %p121 = scmp.eq.s32.totalorder %s36, 0
      %p122 = por %p120, %p121
      %s123 = ssub.s32 %s38, %s45
      %p124 = scmp.eq.s32.totalorder %s123, 0
      %s126 = sadd.s32 %s125, 1
      %s127 = scalar_select %p124, %s125, %s126
      %p130 = pneg %p124
      %p131 = scmp.eq.s32.totalorder %s30, 3
      %p132 = por %p130, %p131
      %p133 = scmp.ne.s32.totalorder %s125, %s128
      %p134 = scmp.eq.s32.totalorder %s30, 0
      %p135 = por %p133, %p134
      %p136 = scmp.ne.s32.totalorder %s125, %s128
      %p137 = scmp.eq.s32.totalorder %s35, 3
      %p138 = por %p136, %p137
      %p139 = scmp.ne.s32.totalorder %s128, %s129
      %p140 = scmp.eq.s32.totalorder %s35, 0
      %p141 = por %p139, %p140
      %p142 = scmp.ne.s32.totalorder %s128, %s129
      %p143 = scmp.eq.s32.totalorder %s36, 3
      %p144 = por %p142, %p143
      %p146 = scmp.ne.s32.totalorder %s129, %s145
      %p147 = scmp.eq.s32.totalorder %s36, 0
      %p148 = por %p146, %p147
      %s150 = sadd.s32 %s149, 1
      %p153 = scmp.eq.s32.totalorder %s30, 3
      %p154 = scmp.ne.s32.totalorder %s149, %s151
      %p155 = scmp.eq.s32.totalorder %s30, 0
      %p156 = por %p154, %p155
      %p157 = scmp.ne.s32.totalorder %s149, %s151
      %p158 = scmp.eq.s32.totalorder %s35, 3
      %p159 = por %p157, %p158
      %p160 = scmp.ne.s32.totalorder %s151, %s152
      %p161 = scmp.eq.s32.totalorder %s35, 0
      %p162 = por %p160, %p161
      %p163 = scmp.ne.s32.totalorder %s151, %s152
      %p164 = scmp.eq.s32.totalorder %s36, 3
      %p165 = por %p163, %p164
      %p167 = scmp.ne.s32.totalorder %s152, %s166
      %p168 = scmp.eq.s32.totalorder %s36, 0
      %p169 = por %p167, %p168
      %s171 = sadd.s32 %s170, 1
      %p174 = scmp.eq.s32.totalorder %s30, 3
      %p175 = scmp.ne.s32.totalorder %s170, %s172
      %p176 = scmp.eq.s32.totalorder %s30, 0
      %p177 = por %p175, %p176
      %p178 = scmp.ne.s32.totalorder %s170, %s172
      %p179 = scmp.eq.s32.totalorder %s35, 3
      %p180 = por %p178, %p179
      %p181 = scmp.ne.s32.totalorder %s172, %s173
      %p182 = scmp.eq.s32.totalorder %s35, 0
      %p183 = por %p181, %p182
      %p184 = scmp.ne.s32.totalorder %s172, %s173
      %p185 = scmp.eq.s32.totalorder %s36, 3
      %p186 = por %p184, %p185
      %p188 = scmp.ne.s32.totalorder %s173, %s187
      %p189 = scmp.eq.s32.totalorder %s36, 0
      %p190 = por %p188, %p189
      %s192 = sadd.s32 %s191, 1
      %p195 = scmp.eq.s32.totalorder %s30, 3
      %p196 = scmp.ne.s32.totalorder %s191, %s193
      %p197 = scmp.eq.s32.totalorder %s30, 0
      %p198 = por %p196, %p197
      %p199 = scmp.ne.s32.totalorder %s191, %s193
      %p200 = scmp.eq.s32.totalorder %s35, 3
      %p201 = por %p199, %p200
      %p202 = scmp.ne.s32.totalorder %s193, %s194
      %p203 = scmp.eq.s32.totalorder %s35, 0
      %p204 = por %p202, %p203
      %p205 = scmp.ne.s32.totalorder %s193, %s194
      %p206 = scmp.eq.s32.totalorder %s36, 3
      %p207 = por %p205, %p206
      %p209 = scmp.ne.s32.totalorder %s194, %s208
      %p210 = scmp.eq.s32.totalorder %s36, 0
      %p211 = por %p209, %p210
      %s213 = sadd.s32 %s212, 1
      %p216 = scmp.eq.s32.totalorder %s30, 3
      %p217 = scmp.ne.s32.totalorder %s212, %s214
      %p218 = scmp.eq.s32.totalorder %s30, 0
      %p219 = por %p217, %p218
      %p220 = scmp.ne.s32.totalorder %s212, %s214
      %p221 = scmp.eq.s32.totalorder %s35, 3
      %p222 = por %p220, %p221
      %p223 = scmp.ne.s32.totalorder %s214, %s215
      %p224 = scmp.eq.s32.totalorder %s35, 0
      %p225 = por %p223, %p224
      %p226 = scmp.ne.s32.totalorder %s214, %s215
      %p227 = scmp.eq.s32.totalorder %s36, 3
      %p228 = por %p226, %p227
      %p230 = scmp.ne.s32.totalorder %s215, %s229
      %p231 = scmp.eq.s32.totalorder %s36, 0
      %p232 = por %p230, %p231
      %s234 = sadd.s32 %s233, 1
      %p237 = scmp.eq.s32.totalorder %s30, 3
      %p238 = scmp.ne.s32.totalorder %s233, %s235
      %p239 = scmp.eq.s32.totalorder %s30, 0
      %p240 = por %p238, %p239
      %p241 = scmp.ne.s32.totalorder %s233, %s235
      %p242 = scmp.eq.s32.totalorder %s35, 3
      %p243 = por %p241, %p242
      %p244 = scmp.ne.s32.totalorder %s235, %s236
      %p245 = scmp.eq.s32.totalorder %s35, 0
      %p246 = por %p244, %p245
      %p247 = scmp.ne.s32.totalorder %s235, %s236
      %p248 = scmp.eq.s32.totalorder %s36, 3
      %p249 = por %p247, %p248
      %p251 = scmp.ne.s32.totalorder %s236, %s250
      %p252 = scmp.eq.s32.totalorder %s36, 0
      %p253 = por %p251, %p252
      %s255 = sadd.s32 %s254, 1
      %p258 = scmp.eq.s32.totalorder %s30, 3
      %p259 = scmp.ne.s32.totalorder %s254, %s256
      %p260 = scmp.eq.s32.totalorder %s30, 0
      %p261 = por %p259, %p260
      %p262 = scmp.ne.s32.totalorder %s254, %s256
      %p263 = scmp.eq.s32.totalorder %s35, 3
      %p264 = por %p262, %p263
      %p265 = scmp.ne.s32.totalorder %s256, %s257
      %p266 = scmp.eq.s32.totalorder %s35, 0
      %p267 = por %p265, %p266
      %p268 = scmp.ne.s32.totalorder %s256, %s257
      %p269 = scmp.eq.s32.totalorder %s36, 3
      %p270 = por %p268, %p269
      %p272 = scmp.ne.s32.totalorder %s257, %s271
      %p273 = scmp.eq.s32.totalorder %s36, 0
      %p274 = por %p272, %p273
      %s276 = sadd.s32 %s275, 1
      %p279 = scmp.eq.s32.totalorder %s30, 3
      %p280 = scmp.ne.s32.totalorder %s275, %s277
      %p281 = scmp.eq.s32.totalorder %s30, 0
      %p282 = por %p280, %p281
      %p283 = scmp.ne.s32.totalorder %s275, %s277
      %p284 = scmp.eq.s32.totalorder %s35, 3
      %p285 = por %p283, %p284
      %p286 = scmp.ne.s32.totalorder %s277, %s278
      %p287 = scmp.eq.s32.totalorder %s35, 0
      %p288 = por %p286, %p287
      %p289 = scmp.ne.s32.totalorder %s277, %s278
      %p290 = scmp.eq.s32.totalorder %s36, 3
      %p291 = por %p289, %p290
      %p293 = scmp.ne.s32.totalorder %s278, %s292
      %p294 = scmp.eq.s32.totalorder %s36, 0
      %p295 = por %p293, %p294
      %s297 = sadd.s32 %s296, 1
      %p300 = scmp.eq.s32.totalorder %s30, 3
      %p301 = scmp.ne.s32.totalorder %s296, %s298
      %p302 = scmp.eq.s32.totalorder %s30, 0
      %p303 = por %p301, %p302
      %p304 = scmp.ne.s32.totalorder %s296, %s298
      %p305 = scmp.eq.s32.totalorder %s35, 3
      %p306 = por %p304, %p305
      %p307 = scmp.ne.s32.totalorder %s298, %s299
      %p308 = scmp.eq.s32.totalorder %s35, 0
      %p309 = por %p307, %p308
      %p310 = scmp.ne.s32.totalorder %s298, %s299
      %p311 = scmp.eq.s32.totalorder %s36, 3
      %p312 = por %p310, %p311
      %p314 = scmp.ne.s32.totalorder %s299, %s313
      %p315 = scmp.eq.s32.totalorder %s36, 0
      %p316 = por %p314, %p315
      %s318 = sadd.s32 %s317, 1
      %p321 = scmp.eq.s32.totalorder %s30, 3
      %p322 = scmp.ne.s32.totalorder %s317, %s319
      %p323 = scmp.eq.s32.totalorder %s30, 0
      %p324 = por %p322, %p323
      %p325 = scmp.ne.s32.totalorder %s317, %s319
      %p326 = scmp.eq.s32.totalorder %s35, 3
      %p327 = por %p325, %p326
      %p328 = scmp.ne.s32.totalorder %s319, %s320
      %p329 = scmp.eq.s32.totalorder %s35, 0
      %p330 = por %p328, %p329
      %p331 = scmp.ne.s32.totalorder %s319, %s320
      %p332 = scmp.eq.s32.totalorder %s36, 3
      %p333 = por %p331, %p332
      %p335 = scmp.ne.s32.totalorder %s320, %s334
      %p336 = scmp.eq.s32.totalorder %s36, 0
      %p337 = por %p335, %p336
      %s339 = sadd.s32 %s338, 1
      %p342 = scmp.eq.s32.totalorder %s30, 3
      %p343 = scmp.ne.s32.totalorder %s338, %s340
      %p344 = scmp.eq.s32.totalorder %s30, 0
      %p345 = por %p343, %p344
      %p346 = scmp.ne.s32.totalorder %s338, %s340
      %p347 = scmp.eq.s32.totalorder %s35, 3
      %p348 = por %p346, %p347
      %p349 = scmp.ne.s32.totalorder %s340, %s341
      %p350 = scmp.eq.s32.totalorder %s35, 0
      %p351 = por %p349, %p350
      %p352 = scmp.ne.s32.totalorder %s340, %s341
      %p353 = scmp.eq.s32.totalorder %s36, 3
      %p354 = por %p352, %p353
      %p356 = scmp.ne.s32.totalorder %s341, %s355
      %p357 = scmp.eq.s32.totalorder %s36, 0
      %p358 = por %p356, %p357
      %s360 = sadd.s32 %s359, 1
      %p363 = scmp.eq.s32.totalorder %s30, 3
      %p364 = scmp.ne.s32.totalorder %s359, %s361
      %p365 = scmp.eq.s32.totalorder %s30, 0
      %p366 = por %p364, %p365
      %p367 = scmp.ne.s32.totalorder %s359, %s361
      %p368 = scmp.eq.s32.totalorder %s35, 3
      %p369 = por %p367, %p368
      %p370 = scmp.ne.s32.totalorder %s361, %s362
      %p371 = scmp.eq.s32.totalorder %s35, 0
      %p372 = por %p370, %p371
      %p373 = scmp.ne.s32.totalorder %s361, %s362
      %p374 = scmp.eq.s32.totalorder %s36, 3
      %p375 = por %p373, %p374
      %p377 = scmp.ne.s32.totalorder %s362, %s376
      %p378 = scmp.eq.s32.totalorder %s36, 0
      %p379 = por %p377, %p378
      %s381 = sadd.s32 %s380, 1
      %p384 = scmp.eq.s32.totalorder %s30, 3
      %p385 = scmp.ne.s32.totalorder %s380, %s382
      %p386 = scmp.eq.s32.totalorder %s30, 0
      %p387 = por %p385, %p386
      %p388 = scmp.ne.s32.totalorder %s380, %s382
      %p389 = scmp.eq.s32.totalorder %s35, 3
      %p390 = por %p388, %p389
      %p391 = scmp.ne.s32.totalorder %s382, %s383
      %p392 = scmp.eq.s32.totalorder %s35, 0
      %p393 = por %p391, %p392
      %p394 = scmp.ne.s32.totalorder %s382, %s383
      %p395 = scmp.eq.s32.totalorder %s36, 3
      %p396 = por %p394, %p395
      %p398 = scmp.ne.s32.totalorder %s383, %s397
      %p399 = scmp.eq.s32.totalorder %s36, 0
      %p400 = por %p398, %p399
      %s402 = sadd.s32 %s401, 1
      %p405 = scmp.eq.s32.totalorder %s30, 3
      %p406 = scmp.ne.s32.totalorder %s401, %s403
      %p407 = scmp.eq.s32.totalorder %s30, 0
      %p408 = por %p406, %p407
      %p409 = scmp.ne.s32.totalorder %s401, %s403
      %p410 = scmp.eq.s32.totalorder %s35, 3
      %p411 = por %p409, %p410
      %p412 = scmp.ne.s32.totalorder %s403, %s404
      %p413 = scmp.eq.s32.totalorder %s35, 0
      %p414 = por %p412, %p413
      %p415 = scmp.ne.s32.totalorder %s403, %s404
      %p416 = scmp.eq.s32.totalorder %s36, 3
      %p417 = por %p415, %p416
      %p419 = scmp.ne.s32.totalorder %s404, %s418
      %p420 = scmp.eq.s32.totalorder %s36, 0
      %p421 = por %p419, %p420
      %s423 = sadd.s32 %s422, 1
      %p426 = scmp.eq.s32.totalorder %s30, 3
      %p427 = scmp.ne.s32.totalorder %s422, %s424
      %p428 = scmp.eq.s32.totalorder %s30, 0
      %p429 = por %p427, %p428
      %p430 = scmp.ne.s32.totalorder %s422, %s424
      %p431 = scmp.eq.s32.totalorder %s35, 3
      %p432 = por %p430, %p431
      %p433 = scmp.ne.s32.totalorder %s424, %s425
      %p434 = scmp.eq.s32.totalorder %s35, 0
      %p435 = por %p433, %p434
      %p436 = scmp.ne.s32.totalorder %s424, %s425
      %p437 = scmp.eq.s32.totalorder %s36, 3
      %p438 = por %p436, %p437
      %p440 = scmp.ne.s32.totalorder %s425, %s439
      %p441 = scmp.eq.s32.totalorder %s36, 0
      %p442 = por %p440, %p441
      %s444 = sadd.s32 %s443, 1
      %p447 = scmp.eq.s32.totalorder %s30, 3
      %p448 = scmp.ne.s32.totalorder %s443, %s445
      %p449 = scmp.eq.s32.totalorder %s30, 0
      %p450 = por %p448, %p449
      %p451 = scmp.ne.s32.totalorder %s443, %s445
      %p452 = scmp.eq.s32.totalorder %s35, 3
      %p453 = por %p451, %p452
      %p454 = scmp.ne.s32.totalorder %s445, %s446
      %p455 = scmp.eq.s32.totalorder %s35, 0
      %p456 = por %p454, %p455
      %p457 = scmp.ne.s32.totalorder %s445, %s446
      %p458 = scmp.eq.s32.totalorder %s36, 3
      %p459 = por %p457, %p458
      %p461 = scmp.ne.s32.totalorder %s446, %s460
      %p462 = scmp.eq.s32.totalorder %s36, 0
      %p463 = por %p461, %p462
      %s465 = sadd.s32 %s464, 1
      %p468 = scmp.eq.s32.totalorder %s30, 3
      %p469 = scmp.ne.s32.totalorder %s464, %s466
      %p470 = scmp.eq.s32.totalorder %s30, 0
      %p471 = por %p469, %p470
      %p472 = scmp.ne.s32.totalorder %s464, %s466
      %p473 = scmp.eq.s32.totalorder %s35, 3
      %p474 = por %p472, %p473
      %p475 = scmp.ne.s32.totalorder %s466, %s467
      %p476 = scmp.eq.s32.totalorder %s35, 0
      %p477 = por %p475, %p476
      %p478 = scmp.ne.s32.totalorder %s466, %s467
      %p479 = scmp.eq.s32.totalorder %s36, 3
      %p480 = por %p478, %p479
      %p482 = scmp.ne.s32.totalorder %s467, %s481
      %p483 = scmp.eq.s32.totalorder %s36, 0
      %p484 = por %p482, %p483
      %s486 = sadd.s32 %s485, 1
      %p489 = scmp.eq.s32.totalorder %s30, 3
      %p490 = scmp.ne.s32.totalorder %s485, %s487
      %p491 = scmp.eq.s32.totalorder %s30, 0
      %p492 = por %p490, %p491
      %p493 = scmp.ne.s32.totalorder %s485, %s487
      %p494 = scmp.eq.s32.totalorder %s35, 3
      %p495 = por %p493, %p494
      %p496 = scmp.ne.s32.totalorder %s487, %s488
      %p497 = scmp.eq.s32.totalorder %s35, 0
      %p498 = por %p496, %p497
      %p499 = scmp.ne.s32.totalorder %s487, %s488
      %p500 = scmp.eq.s32.totalorder %s36, 3
      %p501 = por %p499, %p500
      %p503 = scmp.ne.s32.totalorder %s488, %s502
      %p504 = scmp.eq.s32.totalorder %s36, 0
      %p505 = por %p503, %p504
      %s507 = sadd.s32 %s506, 1
      %p510 = scmp.eq.s32.totalorder %s30, 3
      %p511 = scmp.ne.s32.totalorder %s506, %s508
      %p512 = scmp.eq.s32.totalorder %s30, 0
      %p513 = por %p511, %p512
      %p514 = scmp.ne.s32.totalorder %s506, %s508
      %p515 = scmp.eq.s32.totalorder %s35, 3
      %p516 = por %p514, %p515
      %p517 = scmp.ne.s32.totalorder %s508, %s509
      %p518 = scmp.eq.s32.totalorder %s35, 0
      %p519 = por %p517, %p518
      %p520 = scmp.ne.s32.totalorder %s508, %s509
      %p521 = scmp.eq.s32.totalorder %s36, 3
      %p522 = por %p520, %p521
      %p524 = scmp.ne.s32.totalorder %s509, %s523
      %p525 = scmp.eq.s32.totalorder %s36, 0
      %p526 = por %p524, %p525
      %s528 = sadd.s32 %s527, 1
      %p531 = scmp.eq.s32.totalorder %s30, 3
      %p532 = scmp.ne.s32.totalorder %s527, %s529
      %p533 = scmp.eq.s32.totalorder %s30, 0
      %p534 = por %p532, %p533
      %p535 = scmp.ne.s32.totalorder %s527, %s529
      %p536 = scmp.eq.s32.totalorder %s35, 3
      %p537 = por %p535, %p536
      %p538 = scmp.ne.s32.totalorder %s529, %s530
      %p539 = scmp.eq.s32.totalorder %s35, 0
      %p540 = por %p538, %p539
      %p541 = scmp.ne.s32.totalorder %s529, %s530
      %p542 = scmp.eq.s32.totalorder %s36, 3
      %p543 = por %p541, %p542
      %p545 = scmp.ne.s32.totalorder %s530, %s544
      %p546 = scmp.eq.s32.totalorder %s36, 0
      %p547 = por %p545, %p546
      %s549 = sadd.s32 %s548, 1
      %p552 = scmp.eq.s32.totalorder %s30, 3
      %p553 = scmp.ne.s32.totalorder %s548, %s550
      %p554 = scmp.eq.s32.totalorder %s30, 0
      %p555 = por %p553, %p554
      %p556 = scmp.ne.s32.totalorder %s548, %s550
      %p557 = scmp.eq.s32.totalorder %s35, 3
      %p558 = por %p556, %p557
      %p559 = scmp.ne.s32.totalorder %s550, %s551
      %p560 = scmp.eq.s32.totalorder %s35, 0
      %p561 = por %p559, %p560
      %p562 = scmp.ne.s32.totalorder %s550, %s551
      %p563 = scmp.eq.s32.totalorder %s36, 3
      %p564 = por %p562, %p563
      %p566 = scmp.ne.s32.totalorder %s551, %s565
      %p567 = scmp.eq.s32.totalorder %s36, 0
      %p568 = por %p566, %p567
      %p569 = scmp.le.s32.totalorder 1, %s30
      %p570 = scmp.lt.s32.totalorder %s30, 5
      %p571 = pnand %p569, %p570
      %p572 = pneg %p571
      // Predicated region
      $region9: #{aa_gat_forward.1} parent=5 // pred_check
        _
      $region10: #{aa_gat_forward.1} parent=5 // pred_check_branch
        %574 = sbr.rel (%p571) target = $region12
      $region11: #{aa_gat_forward.1} parent=5 // pred_region
        %s575 = ssub.s32 %s30, 1
        // Predicated region
        $region13: #{aa_gat_forward.1} parent=11 // pred_check
          %p576 = pneg %p63
        $region14: #{aa_gat_forward.1} parent=11 // pred_check_branch
          %578 = sbr.rel (%p576) target = $region16
        $region15: #{aa_gat_forward.1} parent=11 // pred_region
          _
        $region16: #{aa_gat_forward.1} parent=11 // pred_fallthru
          _
        // Predicated region
        $region17: #{aa_gat_forward.1} parent=11 // pred_check
          %p579 = pneg %p162
        $region18: #{aa_gat_forward.1} parent=11 // pred_check_branch
          %581 = sbr.rel (%p579) target = $region20
        $region19: #{aa_gat_forward.1} parent=11 // pred_region
          _
        $region20: #{aa_gat_forward.1} parent=11 // pred_fallthru
          _
        // Predicated region
        $region21: #{aa_gat_forward.1} parent=11 // pred_check
          %p582 = pneg %p183
        $region22: #{aa_gat_forward.1} parent=11 // pred_check_branch
          %584 = sbr.rel (%p582) target = $region24
        $region23: #{aa_gat_forward.1} parent=11 // pred_region
          _
        $region24: #{aa_gat_forward.1} parent=11 // pred_fallthru
          _
        // Predicated region
        $region25: #{aa_gat_forward.1} parent=11 // pred_check
          %p585 = pneg %p204
        $region26: #{aa_gat_forward.1} parent=11 // pred_check_branch
          %587 = sbr.rel (%p585) target = $region28
        $region27: #{aa_gat_forward.1} parent=11 // pred_region
          _
        $region28: #{aa_gat_forward.1} parent=11 // pred_fallthru
          _
        // Predicated region
        $region29: #{aa_gat_forward.1} parent=11 // pred_check
          %p588 = pneg %p225
        $region30: #{aa_gat_forward.1} parent=11 // pred_check_branch
          %590 = sbr.rel (%p588) target = $region32
        $region31: #{aa_gat_forward.1} parent=11 // pred_region
          _
        $region32: #{aa_gat_forward.1} parent=11 // pred_fallthru
          _
        // Predicated region
        $region33: #{aa_gat_forward.1} parent=11 // pred_check
          %p591 = pneg %p246
        $region34: #{aa_gat_forward.1} parent=11 // pred_check_branch
          %593 = sbr.rel (%p591) target = $region36
        $region35: #{aa_gat_forward.1} parent=11 // pred_region
          _
        $region36: #{aa_gat_forward.1} parent=11 // pred_fallthru
          _
        // Predicated region
        $region37: #{aa_gat_forward.1} parent=11 // pred_check
          %p594 = pneg %p267
        $region38: #{aa_gat_forward.1} parent=11 // pred_check_branch
          %596 = sbr.rel (%p594) target = $region40
        $region39: #{aa_gat_forward.1} parent=11 // pred_region
          _
        $region40: #{aa_gat_forward.1} parent=11 // pred_fallthru
          _
        // Predicated region
        $region41: #{aa_gat_forward.1} parent=11 // pred_check
          %p597 = pneg %p288
        $region42: #{aa_gat_forward.1} parent=11 // pred_check_branch
          %599 = sbr.rel (%p597) target = $region44
        $region43: #{aa_gat_forward.1} parent=11 // pred_region
          _
        $region44: #{aa_gat_forward.1} parent=11 // pred_fallthru
          _
        // Predicated region
        $region45: #{aa_gat_forward.1} parent=11 // pred_check
          %p600 = pneg %p309
        $region46: #{aa_gat_forward.1} parent=11 // pred_check_branch
          %602 = sbr.rel (%p600) target = $region48
        $region47: #{aa_gat_forward.1} parent=11 // pred_region
          _
        $region48: #{aa_gat_forward.1} parent=11 // pred_fallthru
          _
        // Predicated region
        $region49: #{aa_gat_forward.1} parent=11 // pred_check
          %p603 = pneg %p330
        $region50: #{aa_gat_forward.1} parent=11 // pred_check_branch
          %605 = sbr.rel (%p603) target = $region52
        $region51: #{aa_gat_forward.1} parent=11 // pred_region
          _
        $region52: #{aa_gat_forward.1} parent=11 // pred_fallthru
          _
        // Predicated region
        $region53: #{aa_gat_forward.1} parent=11 // pred_check
          %p606 = pneg %p351
        $region54: #{aa_gat_forward.1} parent=11 // pred_check_branch
          %608 = sbr.rel (%p606) target = $region56
        $region55: #{aa_gat_forward.1} parent=11 // pred_region
          _
        $region56: #{aa_gat_forward.1} parent=11 // pred_fallthru
          _
        // Predicated region
        $region57: #{aa_gat_forward.1} parent=11 // pred_check
          %p609 = pneg %p372
        $region58: #{aa_gat_forward.1} parent=11 // pred_check_branch
          %611 = sbr.rel (%p609) target = $region60
        $region59: #{aa_gat_forward.1} parent=11 // pred_region
          _
        $region60: #{aa_gat_forward.1} parent=11 // pred_fallthru
          _
        // Predicated region
        $region61: #{aa_gat_forward.1} parent=11 // pred_check
          %p612 = pneg %p393
        $region62: #{aa_gat_forward.1} parent=11 // pred_check_branch
          %614 = sbr.rel (%p612) target = $region64
        $region63: #{aa_gat_forward.1} parent=11 // pred_region
          _
        $region64: #{aa_gat_forward.1} parent=11 // pred_fallthru
          _
        // Predicated region
        $region65: #{aa_gat_forward.1} parent=11 // pred_check
          %p615 = pneg %p414
        $region66: #{aa_gat_forward.1} parent=11 // pred_check_branch
          %617 = sbr.rel (%p615) target = $region68
        $region67: #{aa_gat_forward.1} parent=11 // pred_region
          _
        $region68: #{aa_gat_forward.1} parent=11 // pred_fallthru
          _
        // Predicated region
        $region69: #{aa_gat_forward.1} parent=11 // pred_check
          %p618 = pneg %p435
        $region70: #{aa_gat_forward.1} parent=11 // pred_check_branch
          %620 = sbr.rel (%p618) target = $region72
        $region71: #{aa_gat_forward.1} parent=11 // pred_region
          _
        $region72: #{aa_gat_forward.1} parent=11 // pred_fallthru
          _
        // Predicated region
        $region73: #{aa_gat_forward.1} parent=11 // pred_check
          %p621 = pneg %p456
        $region74: #{aa_gat_forward.1} parent=11 // pred_check_branch
          %623 = sbr.rel (%p621) target = $region76
        $region75: #{aa_gat_forward.1} parent=11 // pred_region
          _
        $region76: #{aa_gat_forward.1} parent=11 // pred_fallthru
          _
        // Predicated region
        $region77: #{aa_gat_forward.1} parent=11 // pred_check
          %p624 = pneg %p477
        $region78: #{aa_gat_forward.1} parent=11 // pred_check_branch
          %626 = sbr.rel (%p624) target = $region80
        $region79: #{aa_gat_forward.1} parent=11 // pred_region
          _
        $region80: #{aa_gat_forward.1} parent=11 // pred_fallthru
          _
        // Predicated region
        $region81: #{aa_gat_forward.1} parent=11 // pred_check
          %p627 = pneg %p498
        $region82: #{aa_gat_forward.1} parent=11 // pred_check_branch
          %629 = sbr.rel (%p627) target = $region84
        $region83: #{aa_gat_forward.1} parent=11 // pred_region
          _
        $region84: #{aa_gat_forward.1} parent=11 // pred_fallthru
          _
        // Predicated region
        $region85: #{aa_gat_forward.1} parent=11 // pred_check
          %p630 = pneg %p519
        $region86: #{aa_gat_forward.1} parent=11 // pred_check_branch
          %632 = sbr.rel (%p630) target = $region88
        $region87: #{aa_gat_forward.1} parent=11 // pred_region
          _
        $region88: #{aa_gat_forward.1} parent=11 // pred_fallthru
          _
        // Predicated region
        $region89: #{aa_gat_forward.1} parent=11 // pred_check
          %p633 = pneg %p540
        $region90: #{aa_gat_forward.1} parent=11 // pred_check_branch
          %635 = sbr.rel (%p633) target = $region92
        $region91: #{aa_gat_forward.1} parent=11 // pred_region
          _
        $region92: #{aa_gat_forward.1} parent=11 // pred_fallthru
          _
      $region12: #{aa_gat_forward.1} parent=5 // pred_fallthru
        _
      %p636 = scmp.lt.s32.totalorder %s30, 4
      // Predicated region
      $region93: #{aa_gat_forward.1} parent=5 // pred_check
        %p637 = pneg %p636
      $region94: #{aa_gat_forward.1} parent=5 // pred_check_branch
        %639 = sbr.rel (%p637) target = $region96
      $region95: #{aa_gat_forward.1} parent=5 // pred_region
        // Predicated region
        $region97: #{aa_gat_forward.1} parent=95 // pred_check
          %p640 = pneg %p83
        $region98: #{aa_gat_forward.1} parent=95 // pred_check_branch
          %642 = sbr.rel (%p640) target = $region100
        $region99: #{aa_gat_forward.1} parent=95 // pred_region
          %p643 = scmp.lt.s32.totalorder %s38, 1
          %s644 = scalar_select %p643, %s38, 1
          %s645 = smul.addr %s644, 8
          %s646 = scalar_lea.vmem %s1, %s645
        $region100: #{aa_gat_forward.1} parent=95 // pred_fallthru
          _
        // Predicated region
        $region101: #{aa_gat_forward.1} parent=95 // pred_check
          %p647 = pneg %p109
        $region102: #{aa_gat_forward.1} parent=95 // pred_check_branch
          %649 = sbr.rel (%p647) target = $region104
        $region103: #{aa_gat_forward.1} parent=95 // pred_region
          %p650 = scmp.lt.s32.totalorder %s38, 1
          %s651 = scalar_select %p650, %s38, 1
          %s652 = smul.addr %s651, 8
          %s653 = scalar_lea.vmem %s2, %s652
        $region104: #{aa_gat_forward.1} parent=95 // pred_fallthru
          _
        // Predicated region
        $region105: #{aa_gat_forward.1} parent=95 // pred_check
          %p654 = pneg %p135
        $region106: #{aa_gat_forward.1} parent=95 // pred_check_branch
          %656 = sbr.rel (%p654) target = $region108
        $region107: #{aa_gat_forward.1} parent=95 // pred_region
          %p657 = scmp.lt.s32.totalorder %s38, 1
          %s658 = scalar_select %p657, %s38, 1
          %s659 = smul.addr %s658, 8
          %s660 = scalar_lea.vmem %s3, %s659
        $region108: #{aa_gat_forward.1} parent=95 // pred_fallthru
          _
      $region96: #{aa_gat_forward.1} parent=5 // pred_fallthru
        _
      %p661 = scmp.le.s32.totalorder 1, %s30
      %p662 = scmp.lt.s32.totalorder %s30, 5
      %p663 = pnand %p661, %p662
      %p664 = pneg %p663
      // Predicated region
      $region109: #{aa_gat_forward.1} parent=5 // pred_check
        _
      $region110: #{aa_gat_forward.1} parent=5 // pred_check_branch
        %666 = sbr.rel (%p663) target = $region112
      $region111: #{aa_gat_forward.1} parent=5 // pred_region
        %s667 = ssub.s32 %s30, 1
        %p668 = pneg %p63
        %p669 = pneg %p60
        %p670 = scmp.lt.s32.totalorder %s40, 1
        %s671 = scalar_select %p670, %s40, 1
        %s672 = smul.addr %s671, 8
        %s673 = scalar_lea.vmem %s1, %s672
        %p674 = pneg %p89
        %p675 = pneg %p86
        %p676 = scmp.lt.s32.totalorder %s40, 1
        %s677 = scalar_select %p676, %s40, 1
        %s678 = smul.addr %s677, 8
        %s679 = scalar_lea.vmem %s2, %s678
        %p680 = pneg %p115
        %p681 = pneg %p112
        %p682 = scmp.lt.s32.totalorder %s40, 1
        %s683 = scalar_select %p682, %s40, 1
        %s684 = smul.addr %s683, 8
        %s685 = scalar_lea.vmem %s3, %s684
        %p686 = pneg %p141
        %p687 = pneg %p138
        %p688 = pneg %p162
        %p689 = pneg %p159
        %p690 = pneg %p183
        %p691 = pneg %p180
        %p692 = pneg %p204
        %p693 = pneg %p201
        %p694 = pneg %p225
        %p695 = pneg %p222
        %p696 = pneg %p246
        %p697 = pneg %p243
        %p698 = pneg %p267
        %p699 = pneg %p264
        %p700 = pneg %p288
        %p701 = pneg %p285
        %p702 = pneg %p309
        %p703 = pneg %p306
        %p704 = pneg %p330
        %p705 = pneg %p327
        %p706 = pneg %p351
        %p707 = pneg %p348
        %p708 = pneg %p372
        %p709 = pneg %p369
        %p710 = pneg %p393
        %p711 = pneg %p390
        %p712 = pneg %p414
        %p713 = pneg %p411
        %p714 = pneg %p435
        %p715 = pneg %p432
        %p716 = pneg %p456
        %p717 = pneg %p453
        %p718 = pneg %p477
        %p719 = pneg %p474
        %p720 = pneg %p498
        %p721 = pneg %p495
        %p722 = pneg %p519
        %p723 = pneg %p516
        %p724 = pneg %p540
        %p725 = pneg %p537
        %p726 = pneg %p561
        %p727 = pneg %p558
        %p728 = scmp.lt.s32.totalorder %s40, 1
        %s729 = scalar_select %p728, %s40, 1
        %s730 = smul.addr %s729, 8
        %s731 = scalar_lea.vmem %s1, %s730
        %p732 = scmp.lt.s32.totalorder %s40, 1
        %s733 = scalar_select %p732, %s40, 1
        %s734 = smul.addr %s733, 8
        %s735 = scalar_lea.vmem %s2, %s734
        %p736 = scmp.lt.s32.totalorder %s40, 1
        %s737 = scalar_select %p736, %s40, 1
        %s738 = smul.addr %s737, 8
        %s739 = scalar_lea.vmem %s3, %s738
        %p740 = scmp.eq.s32.totalorder %s39, 0
        %p741 = scmp.eq.s32.totalorder %s40, 0
        %p742 = pnand %p740, %p741
        %p743 = pneg %p742
        // Predicated region
        $region113: #{aa_gat_forward.1} parent=111 // pred_check
          _
        $region114: #{aa_gat_forward.1} parent=111 // pred_check_branch
          %745 = sbr.rel (%p742) target = $region116
        $region115: #{aa_gat_forward.1} parent=111 // pred_region
          %v746 = vld [vmem:[%s0] sm:$0xff]
          %v747 = vld [vmem:[%s4] sm:$0xff]
          %v748 = vld [vmem:[%s5] sm:$0x1]
          %v749 = vld [vmem:[%s6] sm:$0xff]
          %v750 = vld [vmem:[%s6 + $0x8] sm:$0xff]
          %v751 = vld [vmem:[%s6 + $0x10] sm:$0xff]
          %v752 = vld [vmem:[%s6 + $0x18] sm:$0xff]
          %v753 = vld [vmem:[%s7] sm:$0x1]
          %v755 = vperm.slane %v748, 0
          %vm757 = vcmask 64512
          %v759 = vsel %vm757, %v746, 0
          %761 = vmatpush.msra.mxu0 0.0
          %762 = vmatpush.msra.mxu0 0.0
          %763 = vmatpush.msra.mxu0 0.0
          %764 = vmatpush.msra.mxu0 0.0
          %765 = vmatpush.msra.mxu0 0.0
          %766 = vmatpush.msra.mxu0 0.0
          %767 = vmatpush.msra.mxu0 0.0
          %768 = vmatpush.msra.mxu0 0.0
          %769 = vmatpush.msra.mxu0 0.0
          %770 = vmatpush.msra.mxu0 0.0
          %771 = vmatpush.msra.mxu0 0.0
          %772 = vmatpush.msra.mxu0 0.0
          %773 = vmatpush.msra.mxu0 0.0
          %774 = vmatpush.msra.mxu0 0.0
          %775 = vmatpush.msra.mxu0 0.0
          %776 = vmatpush.msra.mxu0 %v747
          %777 = vmatmul.f32.gmra.mxu0 %v759
          %v778 = vpop.f32.mrf.mxu0
          %v779 = vadd.f32 %v755, %v778
          %780 = vdwg.mxu0
          %v781 = vmax.f32 %v779, 0.0
          %v783 = vperm.slane %v753, 0
          %vm785 = vcmask 261120
          %v787 = vsel %vm785, %v781, 0
          %789 = vmatpush.msra.mxu0 0.0
          %790 = vmatpush.msra.mxu0 0.0
          %791 = vmatpush.msra.mxu0 0.0
          %792 = vmatpush.msra.mxu0 0.0
          %793 = vmatpush.msra.mxu0 0.0
          %794 = vmatpush.msra.mxu0 0.0
          %795 = vmatpush.msra.mxu0 0.0
          %796 = vmatpush.msra.mxu0 0.0
          %797 = vmatpush.msra.mxu0 0.0
          %798 = vmatpush.msra.mxu0 0.0
          %799 = vmatpush.msra.mxu0 0.0
          %800 = vmatpush.msra.mxu0 0.0
          %801 = vmatpush.msra.mxu0 %v752
          %802 = vmatpush.msra.mxu0 %v751
          %803 = vmatpush.msra.mxu0 %v750
          %804 = vmatpush.msra.mxu0 %v749
          %805 = vmatmul.f32.gmra.mxu0 %v787
          %v806 = vpop.f32.mrf.mxu0
          %v807 = vadd.f32 %v783, %v806
          %808 = vdwg.mxu0
          %809 = vst.msk [vmem:[#allocation2] sm:$0xff] %vm785, %v807
          %v810 = vld [vmem:[%s12] sm:$0xff]
          %v811 = vld [vmem:[%s12 + $0x8] sm:$0xff]
          %v812 = vld [vmem:[%s12 + $0x10] sm:$0xff]
          %v813 = vld [vmem:[%s12 + $0x18] sm:$0xff]
          %v815 = vsel %vm785, %v807, 0
          %817 = vmatpush.msra.mxu0 0.0
          %818 = vmatpush.msra.mxu0 0.0
          %819 = vmatpush.msra.mxu0 0.0
          %820 = vmatpush.msra.mxu0 0.0
          %821 = vmatpush.msra.mxu0 0.0
          %822 = vmatpush.msra.mxu0 0.0
          %823 = vmatpush.msra.mxu0 0.0
          %824 = vmatpush.msra.mxu0 0.0
          %825 = vmatpush.msra.mxu0 0.0
          %826 = vmatpush.msra.mxu0 0.0
          %827 = vmatpush.msra.mxu0 0.0
          %828 = vmatpush.msra.mxu0 0.0
          %829 = vmatpush.msra.mxu0 %v813
          %830 = vmatpush.msra.mxu0 %v812
          %831 = vmatpush.msra.mxu0 %v811
          %832 = vmatpush.msra.mxu0 %v810
          %833 = vmatmul.f32.gmra.mxu0 %v815
          %v834 = vpop.f32.mrf.mxu0
          %v835 = vadd.f32 0.0, %v834
          %836 = vdwg.mxu0
          %837 = vst [vmem:[#allocation4] sm:$0xff] %v835
          %v838 = vld [vmem:[%s14] sm:$0xff]
          %v839 = vld [vmem:[%s14 + $0x8] sm:$0xff]
          %v840 = vld [vmem:[%s14 + $0x10] sm:$0xff]
          %v841 = vld [vmem:[%s14 + $0x18] sm:$0xff]
          %v842 = vld [vmem:[%s14 + $0x20] sm:$0xff]
          %v843 = vld [vmem:[%s14 + $0x28] sm:$0xff]
          %v844 = vld [vmem:[%s14 + $0x30] sm:$0xff]
          %v845 = vld [vmem:[%s14 + $0x38] sm:$0xff]
          %v846 = vld [vmem:[%s14 + $0x40] sm:$0xff]
          %v847 = vld [vmem:[%s14 + $0x48] sm:$0xff]
          %v848 = vld [vmem:[%s14 + $0x50] sm:$0xff]
          %v849 = vld [vmem:[%s14 + $0x58] sm:$0xff]
          %v850 = vld [vmem:[%s14 + $0x60] sm:$0xff]
          %v851 = vld [vmem:[%s14 + $0x68] sm:$0xff]
          %v852 = vld [vmem:[%s14 + $0x70] sm:$0xff]
          %v853 = vld [vmem:[%s14 + $0x78] sm:$0xff]
          %854 = vmatpush.msra.mxu0 %v853
          %855 = vmatpush.msra.mxu0 %v852
          %856 = vmatpush.msra.mxu0 %v851
          %857 = vmatpush.msra.mxu0 %v850
          %858 = vmatpush.msra.mxu0 %v849
          %859 = vmatpush.msra.mxu0 %v848
          %860 = vmatpush.msra.mxu0 %v847
          %861 = vmatpush.msra.mxu0 %v846
          %862 = vmatpush.msra.mxu0 %v845
          %863 = vmatpush.msra.mxu0 %v844
          %864 = vmatpush.msra.mxu0 %v843
          %865 = vmatpush.msra.mxu0 %v842
          %866 = vmatpush.msra.mxu0 %v841
          %867 = vmatpush.msra.mxu0 %v840
          %868 = vmatpush.msra.mxu0 %v839
          %869 = vmatpush.msra.mxu0 %v838
          %870 = vmatmul.f32.gmra.mxu0 %v835
          %v871 = vpop.f32.mrf.mxu0
          %v872 = vadd.f32 0.0, %v871
          %873 = vdwg.mxu0
          %vm874 = vcmask 31744
          %875 = vst.msk [vmem:[#allocation4 + $0x8] sm:$0xff] %vm874, %v872
          %v876 = vld [vmem:[%s13] sm:$0xff]
          %v877 = vld [vmem:[%s13 + $0x8] sm:$0xff]
          %v878 = vld [vmem:[%s13 + $0x10] sm:$0xff]
          %v879 = vld [vmem:[%s13 + $0x18] sm:$0xff]
          %v880 = vld [vmem:[%s13 + $0x20] sm:$0xff]
          %v881 = vld [vmem:[%s13 + $0x28] sm:$0xff]
          %v882 = vld [vmem:[%s13 + $0x30] sm:$0xff]
          %v883 = vld [vmem:[%s13 + $0x38] sm:$0xff]
          %v884 = vld [vmem:[%s13 + $0x40] sm:$0xff]
          %v885 = vld [vmem:[%s13 + $0x48] sm:$0xff]
          %v886 = vld [vmem:[%s13 + $0x50] sm:$0xff]
          %v887 = vld [vmem:[%s13 + $0x58] sm:$0xff]
          %v888 = vld [vmem:[%s13 + $0x60] sm:$0xff]
          %v889 = vld [vmem:[%s13 + $0x68] sm:$0xff]
          %v890 = vld [vmem:[%s13 + $0x70] sm:$0xff]
          %v891 = vld [vmem:[%s13 + $0x78] sm:$0xff]
          %892 = vmatpush.msra.mxu0 %v891
          %893 = vmatpush.msra.mxu0 %v890
          %894 = vmatpush.msra.mxu0 %v889
          %895 = vmatpush.msra.mxu0 %v888
          %896 = vmatpush.msra.mxu0 %v887
          %897 = vmatpush.msra.mxu0 %v886
          %898 = vmatpush.msra.mxu0 %v885
          %899 = vmatpush.msra.mxu0 %v884
          %900 = vmatpush.msra.mxu0 %v883
          %901 = vmatpush.msra.mxu0 %v882
          %902 = vmatpush.msra.mxu0 %v881
          %903 = vmatpush.msra.mxu0 %v880
          %904 = vmatpush.msra.mxu0 %v879
          %905 = vmatpush.msra.mxu0 %v878
          %906 = vmatpush.msra.mxu0 %v877
          %907 = vmatpush.msra.mxu0 %v876
          %908 = vmatmul.f32.gmra.mxu0 %v835
          %v909 = vpop.f32.mrf.mxu0
          %v910 = vadd.f32 0.0, %v909
          %911 = vdwg.mxu0
          %912 = vst.msk [vmem:[#allocation5] sm:$0xff] %vm874, %v910
          %913 = vst [vmem:[#allocation6] sm:$0xff] 0.0
          %914 = vst.msk [vmem:[#allocation7] sm:$0xff] %vm874, 0.0
          %vm915 = vcmask 24576
          %916 = vst.msk [vmem:[#allocation8] sm:$0x1] %vm915, -1e+30
        $region116: #{aa_gat_forward.1} parent=111 // pred_fallthru
          _
        %p917 = scmp.eq.s32.totalorder %s39, 1
        %p918 = pnand %p917, %p741
        %p919 = pneg %p918
        // Predicated region
        $region117: #{aa_gat_forward.1} parent=111 // pred_check
          _
        $region118: #{aa_gat_forward.1} parent=111 // pred_check_branch
          %921 = sbr.rel (%p918) target = $region120
        $region119: #{aa_gat_forward.1} parent=111 // pred_region
          %v922 = vld [vmem:[#allocation3] sm:$0xff]
          %v923 = vld [vmem:[%s17] sm:$0xff]
          %v924 = vld [vmem:[%s17 + $0x8] sm:$0xff]
          %v925 = vld [vmem:[%s17 + $0x10] sm:$0xff]
          %v926 = vld [vmem:[%s17 + $0x18] sm:$0xff]
          %v927 = vld [vmem:[%s17 + $0x20] sm:$0xff]
          %v928 = vld [vmem:[%s17 + $0x28] sm:$0xff]
          %v929 = vld [vmem:[%s17 + $0x30] sm:$0xff]
          %v930 = vld [vmem:[%s17 + $0x38] sm:$0xff]
          %v931 = vld [vmem:[%s17 + $0x40] sm:$0xff]
          %v932 = vld [vmem:[%s17 + $0x48] sm:$0xff]
          %v933 = vld [vmem:[%s17 + $0x50] sm:$0xff]
          %v934 = vld [vmem:[%s17 + $0x58] sm:$0xff]
          %v935 = vld [vmem:[%s17 + $0x60] sm:$0xff]
          %v936 = vld [vmem:[%s17 + $0x68] sm:$0xff]
          %v937 = vld [vmem:[%s17 + $0x70] sm:$0xff]
          %v938 = vld [vmem:[%s17 + $0x78] sm:$0xff]
          %939 = vmatpush.msra.mxu0 %v938
          %940 = vmatpush.msra.mxu0 %v937
          %941 = vmatpush.msra.mxu0 %v936
          %942 = vmatpush.msra.mxu0 %v935
          %943 = vmatpush.msra.mxu0 %v934
          %944 = vmatpush.msra.mxu0 %v933
          %945 = vmatpush.msra.mxu0 %v932
          %946 = vmatpush.msra.mxu0 %v931
          %947 = vmatpush.msra.mxu0 %v930
          %948 = vmatpush.msra.mxu0 %v929
          %949 = vmatpush.msra.mxu0 %v928
          %950 = vmatpush.msra.mxu0 %v927
          %951 = vmatpush.msra.mxu0 %v926
          %952 = vmatpush.msra.mxu0 %v925
          %953 = vmatpush.msra.mxu0 %v924
          %954 = vmatpush.msra.mxu0 %v923
          %955 = vmatmul.f32.gmra.mxu0 %v922
          %v956 = vpop.f32.mrf.mxu0
          %v957 = vadd.f32 0.0, %v956
          %958 = vdwg.mxu0
          %959 = vst [vmem:[#allocation4] sm:$0xff] %v957
          %v960 = vld [vmem:[%s19] sm:$0xff]
          %v961 = vld [vmem:[%s19 + $0x8] sm:$0xff]
          %v962 = vld [vmem:[%s19 + $0x10] sm:$0xff]
          %v963 = vld [vmem:[%s19 + $0x18] sm:$0xff]
          %v964 = vld [vmem:[%s19 + $0x20] sm:$0xff]
          %v965 = vld [vmem:[%s19 + $0x28] sm:$0xff]
          %v966 = vld [vmem:[%s19 + $0x30] sm:$0xff]
          %v967 = vld [vmem:[%s19 + $0x38] sm:$0xff]
          %v968 = vld [vmem:[%s19 + $0x40] sm:$0xff]
          %v969 = vld [vmem:[%s19 + $0x48] sm:$0xff]
          %v970 = vld [vmem:[%s19 + $0x50] sm:$0xff]
          %v971 = vld [vmem:[%s19 + $0x58] sm:$0xff]
          %v972 = vld [vmem:[%s19 + $0x60] sm:$0xff]
          %v973 = vld [vmem:[%s19 + $0x68] sm:$0xff]
          %v974 = vld [vmem:[%s19 + $0x70] sm:$0xff]
          %v975 = vld [vmem:[%s19 + $0x78] sm:$0xff]
          %976 = vmatpush.msra.mxu0 %v975
          %977 = vmatpush.msra.mxu0 %v974
          %978 = vmatpush.msra.mxu0 %v973
          %979 = vmatpush.msra.mxu0 %v972
          %980 = vmatpush.msra.mxu0 %v971
          %981 = vmatpush.msra.mxu0 %v970
          %982 = vmatpush.msra.mxu0 %v969
          %983 = vmatpush.msra.mxu0 %v968
          %984 = vmatpush.msra.mxu0 %v967
          %985 = vmatpush.msra.mxu0 %v966
          %986 = vmatpush.msra.mxu0 %v965
          %987 = vmatpush.msra.mxu0 %v964
          %988 = vmatpush.msra.mxu0 %v963
          %989 = vmatpush.msra.mxu0 %v962
          %990 = vmatpush.msra.mxu0 %v961
          %991 = vmatpush.msra.mxu0 %v960
          %992 = vmatmul.f32.gmra.mxu0 %v957
          %v993 = vpop.f32.mrf.mxu0
          %v994 = vadd.f32 0.0, %v993
          %995 = vdwg.mxu0
          %vm996 = vcmask 31744
          %997 = vst.msk [vmem:[#allocation4 + $0x8] sm:$0xff] %vm996, %v994
          %v998 = vld [vmem:[%s18] sm:$0xff]
          %v999 = vld [vmem:[%s18 + $0x8] sm:$0xff]
          %v1000 = vld [vmem:[%s18 + $0x10] sm:$0xff]
          %v1001 = vld [vmem:[%s18 + $0x18] sm:$0xff]
          %v1002 = vld [vmem:[%s18 + $0x20] sm:$0xff]
          %v1003 = vld [vmem:[%s18 + $0x28] sm:$0xff]
          %v1004 = vld [vmem:[%s18 + $0x30] sm:$0xff]
          %v1005 = vld [vmem:[%s18 + $0x38] sm:$0xff]
          %v1006 = vld [vmem:[%s18 + $0x40] sm:$0xff]
          %v1007 = vld [vmem:[%s18 + $0x48] sm:$0xff]
          %v1008 = vld [vmem:[%s18 + $0x50] sm:$0xff]
          %v1009 = vld [vmem:[%s18 + $0x58] sm:$0xff]
          %v1010 = vld [vmem:[%s18 + $0x60] sm:$0xff]
          %v1011 = vld [vmem:[%s18 + $0x68] sm:$0xff]
          %v1012 = vld [vmem:[%s18 + $0x70] sm:$0xff]
          %v1013 = vld [vmem:[%s18 + $0x78] sm:$0xff]
          %1014 = vmatpush.msra.mxu0 %v1013
          %1015 = vmatpush.msra.mxu0 %v1012
          %1016 = vmatpush.msra.mxu0 %v1011
          %1017 = vmatpush.msra.mxu0 %v1010
          %1018 = vmatpush.msra.mxu0 %v1009
          %1019 = vmatpush.msra.mxu0 %v1008
          %1020 = vmatpush.msra.mxu0 %v1007
          %1021 = vmatpush.msra.mxu0 %v1006
          %1022 = vmatpush.msra.mxu0 %v1005
          %1023 = vmatpush.msra.mxu0 %v1004
          %1024 = vmatpush.msra.mxu0 %v1003
          %1025 = vmatpush.msra.mxu0 %v1002
          %1026 = vmatpush.msra.mxu0 %v1001
          %1027 = vmatpush.msra.mxu0 %v1000
          %1028 = vmatpush.msra.mxu0 %v999
          %1029 = vmatpush.msra.mxu0 %v998
          %1030 = vmatmul.f32.gmra.mxu0 %v957
          %v1031 = vpop.f32.mrf.mxu0
          %v1032 = vadd.f32 0.0, %v1031
          %1033 = vdwg.mxu0
          %1034 = vst.msk [vmem:[#allocation5] sm:$0xff] %vm996, %v1032
          %1035 = vst [vmem:[#allocation6] sm:$0xff] 0.0
          %1036 = vst.msk [vmem:[#allocation7] sm:$0xff] %vm996, 0.0
          %vm1037 = vcmask 24576
          %1038 = vst.msk [vmem:[#allocation8] sm:$0x1] %vm1037, -1e+30
        $region120: #{aa_gat_forward.1} parent=111 // pred_fallthru
          _
        %s1039 = scalar_select %p740, 1, 0
        %s1040 = scvt.s32.f32 %s1039
        %v1041 = vld [vmem:[%s15] sm:$0xff]
        %v1042 = vld [vmem:[%s15 + $0x8] sm:$0xff]
        %v1043 = vld [vmem:[%s15 + $0x10] sm:$0xff]
        %v1044 = vld [vmem:[%s15 + $0x18] sm:$0xff]
        %v1045 = vstv %s1040
        %v1046 = vmul.f32 %v1045, %v1041
        %v1047 = vmul.f32 %v1045, %v1042
        %v1048 = vmul.f32 %v1045, %v1043
        %v1049 = vmul.f32 %v1045, %v1044
        %s1050 = ssub.f32 1.0, %s1040
        %v1051 = vld [vmem:[%s20] sm:$0xff]
        %v1052 = vld [vmem:[%s20 + $0x8] sm:$0xff]
        %v1053 = vld [vmem:[%s20 + $0x10] sm:$0xff]
        %v1054 = vld [vmem:[%s20 + $0x18] sm:$0xff]
        %v1055 = vstv %s1050
        %v1056 = vmul.f32 %v1055, %v1051
        %v1057 = vmul.f32 %v1055, %v1052
        %v1058 = vmul.f32 %v1055, %v1053
        %v1059 = vmul.f32 %v1055, %v1054
        %v1060 = vadd.f32 %v1046, %v1056
        %v1061 = vadd.f32 %v1047, %v1057
        %v1062 = vadd.f32 %v1048, %v1058
        %v1063 = vadd.f32 %v1049, %v1059
        %v1064 = vld [vmem:[%s16] sm:$0xf]
        %v1065 = vmul.f32 %v1045, %v1064
        %v1066 = vld [vmem:[%s21] sm:$0xf]
        %v1067 = vmul.f32 %v1055, %v1066
        %v1068 = vadd.f32 %v1065, %v1067
        %v1069 = vld [vmem:[%s731] sm:$0xff]
        %v1070 = vld [vmem:[%s8] sm:$0xff]
        %v1071 = vld [vmem:[%s9] sm:$0x1]
        %v1072 = vld [vmem:[%s10] sm:$0xff]
        %v1073 = vld [vmem:[%s10 + $0x8] sm:$0xff]
        %v1074 = vld [vmem:[%s10 + $0x10] sm:$0xff]
        %v1075 = vld [vmem:[%s10 + $0x18] sm:$0xff]
        %v1076 = vld [vmem:[%s11] sm:$0x1]
        %v1078 = vperm.slane %v1071, 0
        %vm1080 = vcmask 64512
        %v1082 = vsel %vm1080, %v1069, 0
        %1084 = vmatpush.msra.mxu0 0.0
        %1085 = vmatpush.msra.mxu0 0.0
        %1086 = vmatpush.msra.mxu0 0.0
        %1087 = vmatpush.msra.mxu0 0.0
        %1088 = vmatpush.msra.mxu0 0.0
        %1089 = vmatpush.msra.mxu0 0.0
        %1090 = vmatpush.msra.mxu0 0.0
        %1091 = vmatpush.msra.mxu0 0.0
        %1092 = vmatpush.msra.mxu0 0.0
        %1093 = vmatpush.msra.mxu0 0.0
        %1094 = vmatpush.msra.mxu0 0.0
        %1095 = vmatpush.msra.mxu0 0.0
        %1096 = vmatpush.msra.mxu0 0.0
        %1097 = vmatpush.msra.mxu0 0.0
        %1098 = vmatpush.msra.mxu0 0.0
        %1099 = vmatpush.msra.mxu0 %v1070
        %1100 = vmatmul.f32.gmra.mxu0 %v1082
        %v1101 = vpop.f32.mrf.mxu0
        %v1102 = vadd.f32 %v1078, %v1101
        %1103 = vdwg.mxu0
        %v1104 = vmax.f32 %v1102, 0.0
        %v1106 = vperm.slane %v1076, 0
        %vm1108 = vcmask 261120
        %v1110 = vsel %vm1108, %v1104, 0
        %1112 = vmatpush.msra.mxu0 0.0
        %1113 = vmatpush.msra.mxu0 0.0
        %1114 = vmatpush.msra.mxu0 0.0
        %1115 = vmatpush.msra.mxu0 0.0
        %1116 = vmatpush.msra.mxu0 0.0
        %1117 = vmatpush.msra.mxu0 0.0
        %1118 = vmatpush.msra.mxu0 0.0
        %1119 = vmatpush.msra.mxu0 0.0
        %1120 = vmatpush.msra.mxu0 0.0
        %1121 = vmatpush.msra.mxu0 0.0
        %1122 = vmatpush.msra.mxu0 0.0
        %1123 = vmatpush.msra.mxu0 0.0
        %1124 = vmatpush.msra.mxu0 %v1075
        %1125 = vmatpush.msra.mxu0 %v1074
        %1126 = vmatpush.msra.mxu0 %v1073
        %1127 = vmatpush.msra.mxu0 %v1072
        %1128 = vmatmul.f32.gmra.mxu0 %v1110
        %v1129 = vpop.f32.mrf.mxu0
        %v1130 = vadd.f32 %v1106, %v1129
        %1131 = vdwg.mxu0
        %v1133 = vsel %vm1108, %v1130, 0
        %1135 = vmatpush.msra.mxu0 0.0
        %1136 = vmatpush.msra.mxu0 0.0
        %1137 = vmatpush.msra.mxu0 0.0
        %1138 = vmatpush.msra.mxu0 0.0
        %1139 = vmatpush.msra.mxu0 0.0
        %1140 = vmatpush.msra.mxu0 0.0
        %1141 = vmatpush.msra.mxu0 0.0
        %1142 = vmatpush.msra.mxu0 0.0
        %1143 = vmatpush.msra.mxu0 0.0
        %1144 = vmatpush.msra.mxu0 0.0
        %1145 = vmatpush.msra.mxu0 0.0
        %1146 = vmatpush.msra.mxu0 0.0
        %1147 = vmatpush.msra.mxu0 %v1063
        %1148 = vmatpush.msra.mxu0 %v1062
        %1149 = vmatpush.msra.mxu0 %v1061
        %1150 = vmatpush.msra.mxu0 %v1060
        %1151 = vmatmul.f32.gmra.mxu0 %v1133
        %v1152 = vpop.f32.mrf.mxu0
        %v1153 = vadd.f32 0.0, %v1152
        %1154 = vdwg.mxu0
        %v1155 = vld [vmem:[%s735] sm:$0xff]
        %v1156 = vld [vmem:[%s739] sm:$0xff]
        %v1157 = vld [vmem:[#allocation4] sm:$0xff]
        %v1158 = vld [vmem:[#allocation4 + $0x8] sm:$0xff]
        %v1160 = vsel %vm1080, %v1156, 0
        %1162 = vmatpush.msra.mxu0 0.0
        %1163 = vmatpush.msra.mxu0 0.0
        %1164 = vmatpush.msra.mxu0 0.0
        %1165 = vmatpush.msra.mxu0 0.0
        %1166 = vmatpush.msra.mxu0 0.0
        %1167 = vmatpush.msra.mxu0 0.0
        %1168 = vmatpush.msra.mxu0 0.0
        %1169 = vmatpush.msra.mxu0 0.0
        %1170 = vmatpush.msra.mxu0 0.0
        %1171 = vmatpush.msra.mxu0 0.0
        %1172 = vmatpush.msra.mxu0 0.0
        %1173 = vmatpush.msra.mxu0 0.0
        %1174 = vmatpush.msra.mxu0 0.0
        %1175 = vmatpush.msra.mxu0 0.0
        %1176 = vmatpush.msra.mxu0 0.0
        %1177 = vmatpush.msra.mxu0 %v1157
        %1178 = vmatmul.f32.gmra.mxu0 %v1160
        %v1179 = vpop.f32.mrf.mxu0
        %v1180 = vadd.f32 0.0, %v1179
        %1181 = vdwg.mxu0
        %1182 = vmatpush.msra.mxu0 0.0
        %1183 = vmatpush.msra.mxu0 0.0
        %1184 = vmatpush.msra.mxu0 0.0
        %1185 = vmatpush.msra.mxu0 0.0
        %1186 = vmatpush.msra.mxu0 0.0
        %1187 = vmatpush.msra.mxu0 0.0
        %1188 = vmatpush.msra.mxu0 0.0
        %1189 = vmatpush.msra.mxu0 0.0
        %1190 = vmatpush.msra.mxu0 0.0
        %1191 = vmatpush.msra.mxu0 0.0
        %1192 = vmatpush.msra.mxu0 0.0
        %1193 = vmatpush.msra.mxu0 0.0
        %1194 = vmatpush.msra.mxu0 0.0
        %1195 = vmatpush.msra.mxu0 0.0
        %1196 = vmatpush.msra.mxu0 0.0
        %1197 = vmatpush.msra.mxu0 %v1158
        %1198 = vmatmul.f32.gmra.mxu0 %v1160
        %v1199 = vpop.f32.mrf.mxu0
        %v1200 = vadd.f32 0.0, %v1199
        %1201 = vdwg.mxu0
        %v1202 = vld [vmem:[#allocation5] sm:$0xff]
        %v1204 = vsel %vm1080, %v1155, 0
        %1206 = vmatpush.msra.mxu0 0.0
        %1207 = vmatpush.msra.mxu0 0.0
        %1208 = vmatpush.msra.mxu0 0.0
        %1209 = vmatpush.msra.mxu0 0.0
        %1210 = vmatpush.msra.mxu0 0.0
        %1211 = vmatpush.msra.mxu0 0.0
        %1212 = vmatpush.msra.mxu0 0.0
        %1213 = vmatpush.msra.mxu0 0.0
        %1214 = vmatpush.msra.mxu0 0.0
        %1215 = vmatpush.msra.mxu0 0.0
        %1216 = vmatpush.msra.mxu0 0.0
        %1217 = vmatpush.msra.mxu0 0.0
        %1218 = vmatpush.msra.mxu0 0.0
        %1219 = vmatpush.msra.mxu0 0.0
        %1220 = vmatpush.msra.mxu0 0.0
        %1221 = vmatpush.msra.mxu0 %v1202
        %1222 = vmatmul.f32.gmra.mxu0 %v1204
        %v1223 = vpop.f32.mrf.mxu0
        %v1224 = vadd.f32 %v1200, %v1223
        %1225 = vdwg.mxu0
        %v1226 = vadd.f32 %v1224, %v1153
        %vm1227 = vcmp.gt.f32.partialorder %v1226, 0.0
        %v1228 = vmul.f32 %v1226, 0.01
        %v1229 = vsel %vm1227, %v1226, %v1228
        %v1230 = vld [vmem:[#allocation8] sm:$0x1]
        %vm1231 = vcmask 31744
        %v1232 = vsel %vm1231, %v1229, -inf
        %v1233 = vrot.slane %v1232, 4
        %v1234 = vmax.f32 %v1232, %v1233
        %v1235 = vrot.slane %v1234, 2
        %v1236 = vmax.f32 %v1234, %v1235
        %v1237 = vrot.slane %v1236, 1
        %v1238 = vmax.f32 %v1236, %v1237
        %v1239 = vmax.f32 %v1230, %v1238
        %v1240 = vsub.f32 %v1230, %v1239
        %v1241 = vmul.f32 %v1240, 1.442695
        %v1242 = vpow.pop %v1241
        %v1243 = vld [vmem:[#allocation7] sm:$0xff]
        %v1245 = vperm.slane %v1242, 0
        %v1247 = vmul.f32 %v1243, %v1245
        %1248 = vst.msk [vmem:[#allocation7] sm:$0xff] %vm1231, %v1247
        %v1249 = vld [vmem:[#allocation6] sm:$0xff]
        %v1250 = vsel %vm1231, %v1242, 0
        %vm1252 = vcmask 1043456
        %v1254 = vsel %vm1252, %v1068, 0
        %1256 = vmatpush.msra.mxu0 0.0
        %1257 = vmatpush.msra.mxu0 0.0
        %1258 = vmatpush.msra.mxu0 0.0
        %1259 = vmatpush.msra.mxu0 0.0
        %1260 = vmatpush.msra.mxu0 0.0
        %1261 = vmatpush.msra.mxu0 0.0
        %1262 = vmatpush.msra.mxu0 0.0
        %1263 = vmatpush.msra.mxu0 0.0
        %1264 = vmatpush.msra.mxu0 0.0
        %1265 = vmatpush.msra.mxu0 0.0
        %1266 = vmatpush.msra.mxu0 0.0
        %1267 = vmatpush.msra.mxu0 0.0
        %1268 = vmatpush.msra.mxu0 0.0
        %1269 = vmatpush.msra.mxu0 0.0
        %1270 = vmatpush.msra.mxu0 0.0
        %1271 = vmatpush.msra.mxu0 %v1254
        %1272 = vmatmul.f32.gmra.mxu0 %v1250
        %v1273 = vpop.f32.mrf.mxu0
        %v1274 = vadd.f32 0.0, %v1273
        %1275 = vdwg.mxu0
        %v1276 = vperm.slane %v1274, 0
        %v1277 = vmul.f32 %v1249, %v1276
        %1278 = vst [vmem:[#allocation6] sm:$0xff] %v1277
        %vm1279 = vcmask 24576
        %1280 = vst.msk [vmem:[#allocation8] sm:$0x1] %vm1279, %v1239
        %v1282 = vperm.slane %v1239, 0
        %v1284 = vsub.f32 %v1229, %v1282
        %v1285 = vmul.f32 %v1284, 1.442695
        %v1286 = vpow.pop %v1285
        %v1288 = vsel %vm1231, %v1286, 0
        %1290 = vmatpush.msra.mxu0 0.0
        %1291 = vmatpush.msra.mxu0 0.0
        %1292 = vmatpush.msra.mxu0 0.0
        %1293 = vmatpush.msra.mxu0 0.0
        %1294 = vmatpush.msra.mxu0 0.0
        %1295 = vmatpush.msra.mxu0 0.0
        %1296 = vmatpush.msra.mxu0 0.0
        %1297 = vmatpush.msra.mxu0 0.0
        %1298 = vmatpush.msra.mxu0 0.0
        %1299 = vmatpush.msra.mxu0 0.0
        %1300 = vmatpush.msra.mxu0 0.0
        %1301 = vmatpush.msra.mxu0 0.0
        %1302 = vmatpush.msra.mxu0 0.0
        %1303 = vmatpush.msra.mxu0 0.0
        %1304 = vmatpush.msra.mxu0 0.0
        %1305 = vmatpush.msra.mxu0 %v1254
        %1306 = vmatmul.f32.gmra.mxu0 %v1288
        %v1307 = vpop.f32.mrf.mxu0
        %v1308 = vadd.f32 0.0, %v1307
        %1309 = vdwg.mxu0
        %v1310 = vld [vmem:[#allocation7] sm:$0xff]
        %1311 = vxpose.xlu0.b32.start [1/16] %v1155, 128
        %1312 = vxpose.xlu0.b32.cont [2/16] 0.0, 128
        %1313 = vxpose.xlu0.b32.cont [3/16] 0.0, 128
        %1314 = vxpose.xlu0.b32.cont [4/16] 0.0, 128
        %1315 = vxpose.xlu0.b32.cont [5/16] 0.0, 128
        %1316 = vxpose.xlu0.b32.cont [6/16] 0.0, 128
        %1317 = vxpose.xlu0.b32.cont [7/16] 0.0, 128
        %1318 = vxpose.xlu0.b32.cont [8/16] 0.0, 128
        %1319 = vxpose.xlu0.b32.cont [9/16] 0.0, 128
        %1320 = vxpose.xlu0.b32.cont [10/16] 0.0, 128
        %1321 = vxpose.xlu0.b32.cont [11/16] 0.0, 128
        %1322 = vxpose.xlu0.b32.cont [12/16] 0.0, 128
        %1323 = vxpose.xlu0.b32.cont [13/16] 0.0, 128
        %1324 = vxpose.xlu0.b32.cont [14/16] 0.0, 128
        %1325 = vxpose.xlu0.b32.cont [15/16] 0.0, 128
        %1326 = vxpose.xlu0.b32.end [16/16] 0.0, 128
        %v1327 = vpop.trf.xlu0
        %v1328 = vpop.trf.xlu0
        %v1329 = vpop.trf.xlu0
        %v1330 = vpop.trf.xlu0
        %v1331 = vpop.trf.xlu0
        %v1332 = vpop.trf.xlu0
        %v1333 = vpop.trf.xlu0
        %v1334 = vpop.trf.xlu0
        %v1335 = vpop.trf.xlu0
        %v1336 = vpop.trf.xlu0
        %v1337 = vpop.trf.xlu0
        %v1338 = vpop.trf.xlu0
        %v1339 = vpop.trf.xlu0
        %v1340 = vpop.trf.xlu0
        %v1341 = vpop.trf.xlu0
        %v1342 = vpop.trf.xlu0
        %v1344 = vsel %vm1080, %v1327, 0
        %1346 = vmatpush.msra.mxu0 0.0
        %1347 = vmatpush.msra.mxu0 0.0
        %1348 = vmatpush.msra.mxu0 0.0
        %1349 = vmatpush.msra.mxu0 0.0
        %1350 = vmatpush.msra.mxu0 0.0
        %1351 = vmatpush.msra.mxu0 0.0
        %1352 = vmatpush.msra.mxu0 0.0
        %1353 = vmatpush.msra.mxu0 0.0
        %1354 = vmatpush.msra.mxu0 0.0
        %1355 = vmatpush.msra.mxu0 0.0
        %1356 = vmatpush.msra.mxu0 0.0
        %1357 = vmatpush.msra.mxu0 0.0
        %1358 = vmatpush.msra.mxu0 0.0
        %1359 = vmatpush.msra.mxu0 0.0
        %1360 = vmatpush.msra.mxu0 0.0
        %1361 = vmatpush.msra.mxu0 %v1286
        %1362 = vmatmul.f32.gmra.mxu0 %v1344
        %v1363 = vpop.f32.mrf.mxu0
        %v1364 = vadd.f32 0.0, %v1363
        %1365 = vdwg.mxu0
        %v1366 = vadd.f32 %v1310, %v1364
        %1367 = vst.msk [vmem:[#allocation7] sm:$0xff] %vm1231, %v1366
        %v1368 = vld [vmem:[#allocation6] sm:$0xff]
        %v1369 = vmul.f32 %v1180, %v1308
        %1370 = vmatpush.msra.mxu0 0.0
        %1371 = vmatpush.msra.mxu0 0.0
        %1372 = vmatpush.msra.mxu0 0.0
        %1373 = vmatpush.msra.mxu0 0.0
        %1374 = vmatpush.msra.mxu0 0.0
        %1375 = vmatpush.msra.mxu0 0.0
        %1376 = vmatpush.msra.mxu0 0.0
        %1377 = vmatpush.msra.mxu0 0.0
        %1378 = vmatpush.msra.mxu0 0.0
        %1379 = vmatpush.msra.mxu0 0.0
        %1380 = vmatpush.msra.mxu0 0.0
        %1381 = vmatpush.msra.mxu0 0.0
        %1382 = vmatpush.msra.mxu0 0.0
        %1383 = vmatpush.msra.mxu0 0.0
        %1384 = vmatpush.msra.mxu0 0.0
        %1385 = vmatpush.msra.mxu0 %v1369
        %1386 = vmatmul.f32.gmra.mxu0 %v1344
        %v1387 = vpop.f32.mrf.mxu0
        %v1388 = vadd.f32 0.0, %v1387
        %1389 = vdwg.mxu0
        %v1390 = vadd.f32 %v1368, %v1388
        %1391 = vst [vmem:[#allocation6] sm:$0xff] %v1390
        %p1392 = scmp.eq.s32.totalorder %s40, 1
        %p1393 = pnand %p740, %p1392
        %p1394 = pneg %p1393
        // Predicated region
        $region121: #{aa_gat_forward.1} parent=111 // pred_check
          _
        $region122: #{aa_gat_forward.1} parent=111 // pred_check_branch
          %1396 = sbr.rel (%p1393) target = $region124
        $region123: #{aa_gat_forward.1} parent=111 // pred_region
          %v1397 = vld [vmem:[#allocation7] sm:$0xff]
          %v1398 = vadd.f32 %v1397, 1e-16
          %v1399 = vrcp.pop %v1398
          %v1400 = vmul.f32 %v1398, %v1399
          %v1401 = vsub.f32 1.0, %v1400
          %v1402 = vmul.f32 %v1399, %v1401
          %v1403 = vadd.f32 %v1399, %v1402
          %vm1404 = vweird.f32 %v1398
          %vm1405 = vweird.f32 %v1399
          %vm1406 = vmor %vm1404, %vm1405
          %v1407 = vsel %vm1406, %v1399, %v1403
          %v1408 = vand.u32 2147483647, %v1398
          %vm1409 = vcmp.eq.f32.partialorder %v1408, 8.507059e+37
          %v1410 = vand.u32 %v1398, 2147483648
          %v1411 = vor.u32 1.1754944e-38, %v1410
          %v1412 = vsel %vm1409, %v1411, %v1407
          %v1413 = vmul.f32 1.0, %v1412
          %v1414 = vld [vmem:[#allocation6] sm:$0xff]
          %v1416 = vsel %vm1231, %v1413, 0
          %1418 = vmatpush.msra.mxu0 0.0
          %1419 = vmatpush.msra.mxu0 0.0
          %1420 = vmatpush.msra.mxu0 0.0
          %1421 = vmatpush.msra.mxu0 0.0
          %1422 = vmatpush.msra.mxu0 0.0
          %1423 = vmatpush.msra.mxu0 0.0
          %1424 = vmatpush.msra.mxu0 0.0
          %1425 = vmatpush.msra.mxu0 0.0
          %1426 = vmatpush.msra.mxu0 0.0
          %1427 = vmatpush.msra.mxu0 0.0
          %1428 = vmatpush.msra.mxu0 0.0
          %1429 = vmatpush.msra.mxu0 0.0
          %1430 = vmatpush.msra.mxu0 0.0
          %1431 = vmatpush.msra.mxu0 0.0
          %1432 = vmatpush.msra.mxu0 0.0
          %1433 = vmatpush.msra.mxu0 %v1254
          %1434 = vmatmul.f32.gmra.mxu0 %v1416
          %v1435 = vpop.f32.mrf.mxu0
          %v1436 = vadd.f32 0.0, %v1435
          %1437 = vdwg.mxu0
          %v1438 = vmul.f32 %v1414, %v1436
          %vm1439 = vcmp.gt.f32.partialorder %v1438, 0.0
          %v1440 = vmin.f32 %v1438, 0.0
          %v1441 = vmul.f32 %v1440, 1.442695
          %v1442 = vpow.pop %v1441
          %v1443 = vsub.f32 %v1442, 1.0
          %v1444 = vsel %vm1439, %v1438, %v1443
          %vm1445 = vcmp.gt.f32.partialorder %v1444, 0.0
          %v1446 = vmin.f32 %v1444, 0.0
          %v1447 = vmul.f32 %v1446, 1.442695
          %v1448 = vpow.pop %v1447
          %v1449 = vsub.f32 %v1448, 1.0
          %v1450 = vsel %vm1445, %v1444, %v1449
          %1451 = vst [vmem:[#allocation3] sm:$0xff] %v1450
        $region124: #{aa_gat_forward.1} parent=111 // pred_fallthru
          _
        %p1452 = pnand %p917, %p1392
        %p1453 = pneg %p1452
        // Predicated region
        $region125: #{aa_gat_forward.1} parent=111 // pred_check
          _
        $region126: #{aa_gat_forward.1} parent=111 // pred_check_branch
          %1455 = sbr.rel (%p1452) target = $region128
        $region127: #{aa_gat_forward.1} parent=111 // pred_region
          %v1456 = vld [vmem:[#allocation7] sm:$0xff]
          %v1457 = vadd.f32 %v1456, 1e-16
          %v1458 = vrcp.pop %v1457
          %v1459 = vmul.f32 %v1457, %v1458
          %v1460 = vsub.f32 1.0, %v1459
          %v1461 = vmul.f32 %v1458, %v1460
          %v1462 = vadd.f32 %v1458, %v1461
          %vm1463 = vweird.f32 %v1457
          %vm1464 = vweird.f32 %v1458
          %vm1465 = vmor %vm1463, %vm1464
          %v1466 = vsel %vm1465, %v1458, %v1462
          %v1467 = vand.u32 2147483647, %v1457
          %vm1468 = vcmp.eq.f32.partialorder %v1467, 8.507059e+37
          %v1469 = vand.u32 %v1457, 2147483648
          %v1470 = vor.u32 1.1754944e-38, %v1469
          %v1471 = vsel %vm1468, %v1470, %v1466
          %v1472 = vmul.f32 1.0, %v1471
          %v1473 = vld [vmem:[#allocation6] sm:$0xff]
          %v1475 = vsel %vm1231, %v1472, 0
          %1477 = vmatpush.msra.mxu0 0.0
          %1478 = vmatpush.msra.mxu0 0.0
          %1479 = vmatpush.msra.mxu0 0.0
          %1480 = vmatpush.msra.mxu0 0.0
          %1481 = vmatpush.msra.mxu0 0.0
          %1482 = vmatpush.msra.mxu0 0.0
          %1483 = vmatpush.msra.mxu0 0.0
          %1484 = vmatpush.msra.mxu0 0.0
          %1485 = vmatpush.msra.mxu0 0.0
          %1486 = vmatpush.msra.mxu0 0.0
          %1487 = vmatpush.msra.mxu0 0.0
          %1488 = vmatpush.msra.mxu0 0.0
          %1489 = vmatpush.msra.mxu0 0.0
          %1490 = vmatpush.msra.mxu0 0.0
          %1491 = vmatpush.msra.mxu0 0.0
          %1492 = vmatpush.msra.mxu0 %v1254
          %1493 = vmatmul.f32.gmra.mxu0 %v1475
          %v1494 = vpop.f32.mrf.mxu0
          %v1495 = vadd.f32 0.0, %v1494
          %1496 = vdwg.mxu0
          %v1497 = vmul.f32 %v1473, %v1495
          %vm1498 = vcmp.gt.f32.partialorder %v1497, 0.0
          %v1499 = vmin.f32 %v1497, 0.0
          %v1500 = vmul.f32 %v1499, 1.442695
          %v1501 = vpow.pop %v1500
          %v1502 = vsub.f32 %v1501, 1.0
          %v1503 = vsel %vm1498, %v1497, %v1502
          %v1504 = vld [vmem:[%s22] sm:$0x1]
          %v1506 = vperm.slane %v1504, 0
          %v1508 = vmul.f32 %v1503, %v1506
          %v1509 = vsub.f32 1.0, %v1504
          %v1510 = vmul.f32 %v1509, -1e+30
          %v1512 = vperm.slane %v1510, 0
          %v1514 = vadd.f32 %v1508, %v1512
          %1515 = vmax.xlane.f32.xlu0 %v1514
          %v1516 = vpop.xlane.xlu0 %1515
          %v1517 = vsub.f32 %v1514, %v1516
          %v1518 = vmul.f32 %v1517, 1.442695
          %v1519 = vpow.pop %v1518
          %1520 = vadd.xlane.f32.xlu0 %v1519
          %v1521 = vpop.xlane.xlu0 %1520
          %v1522 = vlog2.pop %v1521
          %v1523 = vmul.f32 %v1522, 0.6931472
          %v1524 = vadd.f32 %v1516, %v1523
          %v1525 = vsub.f32 %v1503, %v1524
          %1526 = vst [vmem:[#allocation9] sm:$0xff] %v1525
        $region128: #{aa_gat_forward.1} parent=111 // pred_fallthru
          _
        // Predicated region
        $region129: #{aa_gat_forward.1} parent=111 // pred_check
          %p1527 = pneg %p558
        $region130: #{aa_gat_forward.1} parent=111 // pred_check_branch
          %1529 = sbr.rel (%p1527) target = $region132
        $region131: #{aa_gat_forward.1} parent=111 // pred_region
          %1531 = vsyncadd [#allocation10], 0
          %s1533 = sshll.u32 [#allocation9], 4
          %s1534 = int_to_ptr.vmem [resolvable:$true] %s1533
          %s1535 = sshll.u32 %s23, 4
          %s1536 = int_to_ptr.hbm [resolvable:$true] %s1535
          %1538 = dma.vmem_to_hbm [thread:$0]  %s1534, 128, %s1536, [#allocation10]
        $region132: #{aa_gat_forward.1} parent=111 // pred_fallthru
          _
        // Predicated region
        $region133: #{aa_gat_forward.1} parent=111 // pred_check
          %p1539 = pneg %p558
        $region134: #{aa_gat_forward.1} parent=111 // pred_check_branch
          %1541 = sbr.rel (%p1539) target = $region136
        $region135: #{aa_gat_forward.1} parent=111 // pred_region
          %1543 = dma.done [#allocation10], 128
        $region136: #{aa_gat_forward.1} parent=111 // pred_fallthru
          _
      $region112: #{aa_gat_forward.1} parent=5 // pred_fallthru
        _
      %p1544 = scmp.le.s32.totalorder 2, %s30
      // Predicated region
      $region137: #{aa_gat_forward.1} parent=5 // pred_check
        %p1545 = pneg %p1544
      $region138: #{aa_gat_forward.1} parent=5 // pred_check_branch
        %1547 = sbr.rel (%p1545) target = $region140
      $region139: #{aa_gat_forward.1} parent=5 // pred_region
        %s1548 = ssub.s32 %s30, 2
      $region140: #{aa_gat_forward.1} parent=5 // pred_fallthru
        _
    $region6: #{aa_gat_forward.1} parent=1 // loop_footer
      %s34 = sadd.s32 1, %s30
    $region7: #{aa_gat_forward.1} parent=1 // loop_footer_branch
      %29 = sbr.rel target = $region3
    $region8: #{aa_gat_forward.1} parent=1 // loop_exit
      _
    %1549 = vsyncpa [#allocation10], 1
    %s1550 = scalar_lea.sflag [#allocation10], 1
    %1551 = vsyncpa %s1550, 1

</llo_original>
